<compile_context>
chip_gen: v7x
topology: tpu7x:2x2x1
jax: 0.10.0
libtpu: 0.0.40
codegen_flags: <defaults>
</compile_context>

<pallas_src>
import math

import jax
import jax.numpy as jnp
from jax.experimental import pallas as pl
from jax.experimental.pallas import tpu as pltpu


def _round_up(a, b):
    return ((a + b - 1) // b) * b


# -----------------------------------------------------------------------------
# Pallas kernel 1: fused max(vis, ir), per-block L1 partial sum, clamp, *255 pre-scale.
# -----------------------------------------------------------------------------
def _fuse_l1_kernel(vis_ref, ir_ref, gen_ref, xmax_ref, genc_ref, l1_ref):
    vis = vis_ref[...].astype(jnp.float32)
    ir = ir_ref[...].astype(jnp.float32)
    gen = gen_ref[...].astype(jnp.float32)

    x_max = jnp.maximum(vis, ir)
    # FSIM pre-scale (x / data_range * 255, data_range == 1.0) folded into the outputs so
    # the wrapper does not need an extra full-image elementwise pass between the two kernels.
    xmax_ref[...] = x_max * 255.0
    genc_ref[...] = jnp.clip(gen, 1e-5, 1.0) * 255.0

    # L1 numerator uses the *unclamped* generate_img (matches the torch reference).
    diff = jnp.abs(x_max - gen)
    tile_r = diff.shape[0]
    # Per-block partial sum: fold groups of 8 sublanes with pure VPU adds -> (8, 128);
    # the final (tiny) reduce happens in the wrapper.
    l1_ref[0] = jnp.sum(diff.reshape(tile_r // 8, 8, 128), axis=0)


def fuse_max_l1_clamp(image_vis, image_ir, generate_img):
    n, c, h, w = image_vis.shape
    total = n * c * h * w

    # Lane-dense flat view tiled over a 1-D parallel grid (tile_r rows of 128 lanes).
    r_raw = _round_up(total, 128) // 128
    tile_r = min(512, max(8, _round_up(-(-r_raw // 2), 8)))   # multiple of 8, <= 512 rows
    r = _round_up(r_raw, tile_r)
    pad = r * 128 - total
    grid = (r // tile_r,)

    def flat(a):
        fa = a.reshape(-1)
        if pad:
            fa = jnp.pad(fa, (0, pad))            # zero padding contributes 0 to the L1 sum
        return fa.reshape(r, 128)

    vis2, ir2, gen2 = flat(image_vis), flat(image_ir), flat(generate_img)

    blk = pl.BlockSpec((tile_r, 128), lambda i: (i, 0))
    xmax2, genc2, l1p = pl.pallas_call(
        _fuse_l1_kernel,
        out_shape=(
            jax.ShapeDtypeStruct((r, 128), jnp.float32),
            jax.ShapeDtypeStruct((r, 128), jnp.float32),
            jax.ShapeDtypeStruct((grid[0], 8, 128), jnp.float32),
        ),
        grid=grid,
        in_specs=[blk, blk, blk],
        out_specs=(
            blk,
            blk,
            pl.BlockSpec((1, 8, 128), lambda i: (i, 0, 0)),
        ),
        compiler_params=pltpu.CompilerParams(
            dimension_semantics=("parallel",),
            vmem_limit_bytes=48 * 1024 * 1024,
        ),
    )(vis2, ir2, gen2)

    loss_in = jnp.sum(l1p) / total                # F.l1_loss(reduction='mean')

    def unflat(a2):
        fa = a2.reshape(-1)
        if pad:
            fa = fa[:total]
        return fa.reshape(n, c, h, w)

    return unflat(xmax2), unflat(genc2), loss_in


# -----------------------------------------------------------------------------
# Pallas kernel 2: separable Scharr gradients + fused FSIM similarity map + PC pooling.
# -----------------------------------------------------------------------------
_T1 = 0.85
_T2 = 160.0


def _fsim_map_kernel(xp_ref, yp_ref, pcx_ref, pcy_ref, out_ref):
    h = pcx_ref.shape[1]
    w_pad = pcx_ref.shape[2]

    def grad_mag_sq(p_ref):
        # Separable Scharr (conv2d, zero padding): horizontal taps via pltpu.roll on the
        # lane axis (wraparound only touches the zero pad), vertical taps via row-shifted
        # slices of the single loaded zero-padded canvas.
        p = p_ref[0]                                        # (h + 2, w_pad), one VMEM load
        gx = None
        s_top = None
        s_bot = None
        for di, vcoef in ((0, 3.0 / 16.0), (1, 10.0 / 16.0), (2, 3.0 / 16.0)):
            row = p[di:di + h, :]                           # (h, w_pad)
            left = pltpu.roll(row, 1, axis=1)               # column c-1
            right = pltpu.roll(row, w_pad - 1, axis=1)      # column c+1
            diff = right - left                             # [-1, 0, 1] horizontal difference
            gx = diff * vcoef if gx is None else gx + diff * vcoef
            if di != 1:                                     # [3, 10, 3]/16 horizontal smooth
                smooth = 0.1875 * left + 0.625 * row + 0.1875 * right
                if di == 0:
                    s_top = smooth
                else:
                    s_bot = smooth
        gy = s_bot - s_top                                  # vertical [-1, 0, 1] on the smooth
        return gx * gx + gy * gy                            # squared magnitude (no sqrt here)

    gm2_x = grad_mag_sq(xp_ref)
    gm2_y = grad_mag_sq(yp_ref)

    pcx = pcx_ref[0]
    pcy = pcy_ref[0]
    pc_max = jnp.maximum(pcx, pcy)

    # Fused similarity fraction: one sqrt + one (approx, EUP) reciprocal per pixel.
    num = (2.0 * pcx * pcy + _T1) * (2.0 * jnp.sqrt(gm2_x * gm2_y) + _T2) * pc_max
    den = (pcx * pcx + pcy * pcy + _T1) * (gm2_x + gm2_y + _T2)
    res = num * pl.reciprocal(den, approx=True)

    # Padded columns contribute exactly 0 because pc_max is 0 there -> no masking needed.
    out_ref[0, 0:1, :] = jnp.sum(res, axis=0, keepdims=True)
    out_ref[0, 1:2, :] = jnp.sum(pc_max, axis=0, keepdims=True)


# -----------------------------------------------------------------------------
# Phase congruency (plain JAX — FFT-based log-Gabor filter bank).
# -----------------------------------------------------------------------------
def _get_meshgrid(size):
    h, w = size
    if h % 2:
        x = jnp.arange(-(h - 1) / 2, h / 2) / (h - 1)
    else:
        x = jnp.arange(-h / 2, h / 2) / h
    if w % 2:
        y = jnp.arange(-(w - 1) / 2, w / 2) / (w - 1)
    else:
        y = jnp.arange(-w / 2, w / 2) / w
    return jnp.meshgrid(x, y, indexing="ij")


def _lowpassfilter(size, cutoff, n):
    gx, gy = _get_meshgrid(size)
    radius = jnp.sqrt(gx ** 2 + gy ** 2)
    return jnp.fft.ifftshift(1.0 / (1.0 + (radius / cutoff) ** (2 * n)))


def _construct_filters(h, w, scales=4, orientations=4, min_length=6, mult=2,
                       sigma_f=0.55, delta_theta=1.2):
    theta_sigma = math.pi / (orientations * delta_theta)
    gx, gy = _get_meshgrid((h, w))
    radius = jnp.sqrt(gx ** 2 + gy ** 2)
    theta = jnp.arctan2(-gy, gx)
    radius = jnp.fft.ifftshift(radius)
    theta = jnp.fft.ifftshift(theta)
    radius = radius.at[0, 0].set(1.0)
    sintheta = jnp.sin(theta)
    costheta = jnp.cos(theta)

    lp = _lowpassfilter((h, w), cutoff=0.45, n=15)

    log_gabor = []
    for s in range(scales):
        wavelength = min_length * mult ** s
        omega_0 = 1.0 / wavelength
        gf = jnp.exp(-(jnp.log(radius / omega_0) ** 2) / (2 * math.log(sigma_f) ** 2))
        gf = gf * lp
        gf = gf.at[0, 0].set(0.0)
        log_gabor.append(gf)

    spread = []
    for o in range(orientations):
        angl = o * math.pi / orientations
        ds = sintheta * math.cos(angl) - costheta * math.sin(angl)
        dc = costheta * math.cos(angl) + sintheta * math.sin(angl)
        dtheta = jnp.abs(jnp.arctan2(ds, dc))
        spread.append(jnp.exp(-(dtheta ** 2) / (2 * theta_sigma ** 2)))

    spread = jnp.stack(spread)        # (O, H, W)
    log_gabor = jnp.stack(log_gabor)  # (S, H, W)
    filters = jnp.repeat(spread, scales, axis=0) * jnp.tile(log_gabor, (orientations, 1, 1))
    return filters[None].astype(jnp.float32)  # (1, O*S, H, W)


def _phase_congruency(x, scales=4, orientations=4, min_length=6, mult=2,
                      sigma_f=0.55, delta_theta=1.2, k=2.0):
    eps = jnp.finfo(x.dtype).eps
    n, _, h, w = x.shape
    filters = _construct_filters(h, w, scales, orientations, min_length, mult, sigma_f, delta_theta)

    imagefft = jnp.fft.fft2(x)                                     # (N, 1, H, W) complex
    filters_ifft = jnp.fft.ifft2(filters).real * math.sqrt(h * w)  # (1, O*S, H, W)
    eo = jnp.fft.ifft2(imagefft * filters)                         # (N, O*S, H, W) complex
    even_odd = jnp.stack([eo.real, eo.imag], axis=-1).reshape(n, orientations, scales, h, w, 2)

    an = jnp.sqrt(jnp.sum(even_odd ** 2, axis=-1))                 # (N, O, S, H, W)

    em_n = jnp.sum(filters.reshape(1, orientations, scales, h, w)[:, :, :1] ** 2,
                   axis=(-2, -1), keepdims=True)                   # (1, O, 1, 1, 1)

    sum_e = jnp.sum(even_odd[..., 0], axis=2, keepdims=True)
    sum_o = jnp.sum(even_odd[..., 1], axis=2, keepdims=True)
    x_energy = jnp.sqrt(sum_e ** 2 + sum_o ** 2) + eps
    mean_e = sum_e / x_energy
    mean_o = sum_o / x_energy

    even = even_odd[..., 0]
    odd = even_odd[..., 1]
    energy = jnp.sum(even * mean_e + odd * mean_o - jnp.abs(even * mean_o - odd * mean_e),
                     axis=2, keepdims=True)                        # (N, O, 1, H, W)

    abs_eo = jnp.sqrt(jnp.sum(even_odd[:, :, :1] ** 2, axis=-1)).reshape(n, orientations, 1, 1, h * w)
    # torch.median returns the lower of the two middle values for even-length inputs
    sorted_sq = jnp.sort(abs_eo ** 2, axis=-1)
    mid = (h * w - 1) // 2
    median_e2n = sorted_sq[..., mid:mid + 1]
    mean_e2n = -median_e2n / math.log(0.5)
    noise_power = mean_e2n / em_n                                  # (N, O, 1, 1, 1)

    filters_ifft = filters_ifft.reshape(1, orientations, scales, h, w)
    sum_an2 = jnp.sum(filters_ifft ** 2, axis=-3, keepdims=True)
    sum_ai_aj = jnp.zeros((1, orientations, 1, h, w), x.dtype)
    for s in range(scales - 1):
        sum_ai_aj = sum_ai_aj + jnp.sum(filters_ifft[:, :, s:s + 1] * filters_ifft[:, :, s + 1:],
                                        axis=-3, keepdims=True)
    sum_an2 = jnp.sum(sum_an2, axis=(-1, -2), keepdims=True)
    sum_ai_aj = jnp.sum(sum_ai_aj, axis=(-1, -2), keepdims=True)

    noise_energy2 = 2 * noise_power * sum_an2 + 4 * noise_power * sum_ai_aj
    tau = jnp.sqrt(noise_energy2 / 2)
    noise_energy = tau * math.sqrt(math.pi / 2)
    noise_energy_sigma = jnp.sqrt((2 - math.pi / 2) * tau ** 2)
    t = (noise_energy + k * noise_energy_sigma) / 1.7

    energy = jnp.maximum(energy - t, 0.0)
    energy_all = jnp.sum(energy, axis=(1, 2)) + eps                # (N, H, W)
    an_all = jnp.sum(an, axis=(1, 2)) + eps                        # (N, H, W)
    return (energy_all / an_all)[:, None]                          # (N, 1, H, W)


# -----------------------------------------------------------------------------
# FSIM (chromatic=False) with a gridded Pallas hot path for grad/similarity/pooling.
# Inputs are already pre-scaled to [0, 255] by kernel 1 (data_range=1.0 folded there).
# -----------------------------------------------------------------------------
def fsim_prescaled(x255, y255):
    n, c, h, w = x255.shape
    assert c == 1, "chromatic=False fusion path uses single-channel images"

    ks = max(1, round(min(h, w) / 256))
    if ks > 1:  # average-pooling pre-processing (identity at the small shapes used here)
        x255 = jax.lax.reduce_window(x255, 0.0, jax.lax.add,
                                     (1, 1, ks, ks), (1, 1, ks, ks), "VALID") / (ks * ks)
        y255 = jax.lax.reduce_window(y255, 0.0, jax.lax.add,
                                     (1, 1, ks, ks), (1, 1, ks, ks), "VALID") / (ks * ks)
        h, w = x255.shape[-2:]

    pc_x = _phase_congruency(x255)
    pc_y = _phase_congruency(y255)

    # Lane-dense canvases: W padded to a multiple of 128; 1-pixel zero border for the 3x3 conv.
    w_pad = max(128, _round_up(w + 2, 128))
    xp = jnp.pad(x255[:, 0], ((0, 0), (1, 1), (1, w_pad - w - 1)))   # (N, H+2, W_pad)
    yp = jnp.pad(y255[:, 0], ((0, 0), (1, 1), (1, w_pad - w - 1)))
    pcx = jnp.pad(pc_x[:, 0], ((0, 0), (0, 0), (1, w_pad - w - 1)))  # (N, H,   W_pad)
    pcy = jnp.pad(pc_y[:, 0], ((0, 0), (0, 0), (1, w_pad - w - 1)))

    out = pl.pallas_call(
        _fsim_map_kernel,
        out_shape=jax.ShapeDtypeStruct((n, 2, w_pad), jnp.float32),
        grid=(n,),
        in_specs=[
            pl.BlockSpec((1, h + 2, w_pad), lambda b: (b, 0, 0)),
            pl.BlockSpec((1, h + 2, w_pad), lambda b: (b, 0, 0)),
            pl.BlockSpec((1, h, w_pad), lambda b: (b, 0, 0)),
            pl.BlockSpec((1, h, w_pad), lambda b: (b, 0, 0)),
        ],
        out_specs=pl.BlockSpec((1, 2, w_pad), lambda b: (b, 0, 0)),
        compiler_params=pltpu.CompilerParams(
            dimension_semantics=("parallel",),
            vmem_limit_bytes=48 * 1024 * 1024,
        ),
    )(xp, yp, pcx, pcy)

    num = jnp.sum(out[:, 0, :], axis=-1)
    den = jnp.sum(out[:, 1, :], axis=-1)
    return jnp.mean(num / den)   # reduction='mean'


# -----------------------------------------------------------------------------
# Fusionloss.forward
# -----------------------------------------------------------------------------
def fusionloss_forward(image_vis, image_ir, generate_img):
    x_in_max255, gen_clamped255, loss_in = fuse_max_l1_clamp(image_vis, image_ir, generate_img)
    # TODO(synk): the torch `print(max, min)` debug side-effects are omitted.
    fsim_val = fsim_prescaled(x_in_max255, gen_clamped255)
    loss_grad = 1.0 - fsim_val          # FSIMLoss = 1 - FSIM index
    loss_total = loss_in + 10.0 * loss_grad
    return loss_total, loss_in, loss_grad


if __name__ == "__main__":
    key = jax.random.PRNGKey(0)
    k1, k2, k3 = jax.random.split(key, 3)
    N, C, H, W = 2, 1, 32, 32
    image_vis = jax.random.uniform(k1, (N, C, H, W), jnp.float32)
    image_ir = jax.random.uniform(k2, (N, C, H, W), jnp.float32)
    generate_img = jax.random.uniform(k3, (N, C, H, W), jnp.float32)

    loss_total, loss_in, loss_grad = jax.jit(fusionloss_forward)(image_vis, image_ir, generate_img)
    jax.block_until_ready((loss_total, loss_in, loss_grad))
    print("KERNEL_OK")
</pallas_src>

<mosaic_0001>
module attributes {stable_mosaic.version = 11 : i64} {
  func.func @_fuse_l1_kernel(%arg0: i32, %arg1: memref<8x128xf32, #tpu.memory_space<vmem>>, %arg2: memref<8x128xf32, #tpu.memory_space<vmem>>, %arg3: memref<8x128xf32, #tpu.memory_space<vmem>>, %arg4: memref<8x128xf32, #tpu.memory_space<vmem>>, %arg5: memref<8x128xf32, #tpu.memory_space<vmem>>, %arg6: memref<1x8x128xf32, #tpu.memory_space<vmem>>) attributes {dimension_semantics = [#tpu.dimension_semantics<parallel>], iteration_bounds = array<i64: 2>, scalar_prefetch = 0 : i64, scratch_operands = 0 : i64, tpu.core_type = #tpu.core_type<tc>, window_params = [{transform_indices = @transform_0, window_bounds = array<i64: 8, 128>}, {transform_indices = @transform_1, window_bounds = array<i64: 8, 128>}, {transform_indices = @transform_2, window_bounds = array<i64: 8, 128>}, {transform_indices = @transform_3, window_bounds = array<i64: 8, 128>}, {transform_indices = @transform_4, window_bounds = array<i64: 8, 128>}, {transform_indices = @transform_5, window_bounds = array<i64: 1, 8, 128>}]} {
    %c0 = arith.constant 0 : index
    %c0_0 = arith.constant 0 : index
    %0 = vector.load %arg1[%c0, %c0_0] : memref<8x128xf32, #tpu.memory_space<vmem>>, vector<8x128xf32>
    %c0_1 = arith.constant 0 : index
    %c0_2 = arith.constant 0 : index
    %1 = vector.load %arg2[%c0_1, %c0_2] : memref<8x128xf32, #tpu.memory_space<vmem>>, vector<8x128xf32>
    %c0_3 = arith.constant 0 : index
    %c0_4 = arith.constant 0 : index
    %2 = vector.load %arg3[%c0_3, %c0_4] : memref<8x128xf32, #tpu.memory_space<vmem>>, vector<8x128xf32>
    %3 = arith.maximumf %0, %1 : vector<8x128xf32>
    %cst = arith.constant 2.550000e+02 : f32
    %4 = vector.broadcast %cst : f32 to vector<8x128xf32>
    %5 = arith.mulf %3, %4 : vector<8x128xf32>
    %c0_5 = arith.constant 0 : index
    %c0_6 = arith.constant 0 : index
    %6 = vector.load %arg4[%c0_5, %c0_6] : memref<8x128xf32, #tpu.memory_space<vmem>>, vector<8x128xf32>
    tpu.vector_store %arg4[%c0_5, %c0_6], %5 {strides = array<i32>} : memref<8x128xf32, #tpu.memory_space<vmem>>, vector<8x128xf32>,
    %cst_7 = arith.constant 9.99999974E-6 : f32
    %cst_8 = arith.constant 1.000000e+00 : f32
    %7 = vector.broadcast %cst_7 : f32 to vector<8x128xf32>
    %8 = arith.maximumf %7, %2 : vector<8x128xf32>
    %9 = vector.broadcast %cst_8 : f32 to vector<8x128xf32>
    %10 = arith.minimumf %9, %8 : vector<8x128xf32>
    %cst_9 = arith.constant 2.550000e+02 : f32
    %11 = vector.broadcast %cst_9 : f32 to vector<8x128xf32>
    %12 = arith.mulf %10, %11 : vector<8x128xf32>
    %c0_10 = arith.constant 0 : index
    %c0_11 = arith.constant 0 : index
    %13 = vector.load %arg5[%c0_10, %c0_11] : memref<8x128xf32, #tpu.memory_space<vmem>>, vector<8x128xf32>
    tpu.vector_store %arg5[%c0_10, %c0_11], %12 {strides = array<i32>} : memref<8x128xf32, #tpu.memory_space<vmem>>, vector<8x128xf32>,
    %14 = arith.subf %3, %2 : vector<8x128xf32>
    %15 = math.absf %14 : vector<8x128xf32>
    %16 = vector.shape_cast %15 : vector<8x128xf32> to vector<1x8x128xf32>
    %cst_12 = arith.constant dense<0.000000e+00> : vector<8x128xf32>
    %17 = vector.multi_reduction <add>, %16, %cst_12 [0] : vector<1x8x128xf32> to vector<8x128xf32>
    %c0_13 = arith.constant 0 : index
    %c0_14 = arith.constant 0 : index
    %c0_15 = arith.constant 0 : index
    %18 = vector.load %arg6[%c0_13, %c0_14, %c0_15] : memref<1x8x128xf32, #tpu.memory_space<vmem>>, vector<1x8x128xf32>
    %19 = vector.shape_cast %18 : vector<1x8x128xf32> to vector<8x128xf32>
    %20 = vector.shape_cast %17 : vector<8x128xf32> to vector<1x8x128xf32>
    tpu.vector_store %arg6[%c0_13, %c0_14, %c0_15], %20 {strides = array<i32>} : memref<1x8x128xf32, #tpu.memory_space<vmem>>, vector<1x8x128xf32>,
    return
  }
  func.func @transform_0(%arg0: i32) -> (i32, i32) {
    %c0_i32 = arith.constant 0 : i32
    %c0_i32_0 = arith.constant 0 : i32
    return %arg0, %c0_i32 : i32, i32
  }
  func.func @transform_1(%arg0: i32) -> (i32, i32) {
    %c0_i32 = arith.constant 0 : i32
    %c0_i32_0 = arith.constant 0 : i32
    return %arg0, %c0_i32 : i32, i32
  }
  func.func @transform_2(%arg0: i32) -> (i32, i32) {
    %c0_i32 = arith.constant 0 : i32
    %c0_i32_0 = arith.constant 0 : i32
    return %arg0, %c0_i32 : i32, i32
  }
  func.func @transform_3(%arg0: i32) -> (i32, i32) {
    %c0_i32 = arith.constant 0 : i32
    %c0_i32_0 = arith.constant 0 : i32
    return %arg0, %c0_i32 : i32, i32
  }
  func.func @transform_4(%arg0: i32) -> (i32, i32) {
    %c0_i32 = arith.constant 0 : i32
    %c0_i32_0 = arith.constant 0 : i32
    return %arg0, %c0_i32 : i32, i32
  }
  func.func @transform_5(%arg0: i32) -> (i32, i32, i32) {
    %c0_i32 = arith.constant 0 : i32
    %c0_i32_0 = arith.constant 0 : i32
    %c0_i32_1 = arith.constant 0 : i32
    return %arg0, %c0_i32, %c0_i32_0 : i32, i32, i32
  }
}

module attributes {stable_mosaic.version = 11 : i64} {
  func.func @_fsim_map_kernel(%arg0: i32, %arg1: memref<1x34x128xf32, #tpu.memory_space<vmem>>, %arg2: memref<1x34x128xf32, #tpu.memory_space<vmem>>, %arg3: memref<1x32x128xf32, #tpu.memory_space<vmem>>, %arg4: memref<1x32x128xf32, #tpu.memory_space<vmem>>, %arg5: memref<1x2x128xf32, #tpu.memory_space<vmem>>) attributes {dimension_semantics = [#tpu.dimension_semantics<parallel>], iteration_bounds = array<i64: 2>, scalar_prefetch = 0 : i64, scratch_operands = 0 : i64, tpu.core_type = #tpu.core_type<tc>, window_params = [{transform_indices = @transform_0, window_bounds = array<i64: 1, 34, 128>}, {transform_indices = @transform_1, window_bounds = array<i64: 1, 34, 128>}, {transform_indices = @transform_2, window_bounds = array<i64: 1, 32, 128>}, {transform_indices = @transform_3, window_bounds = array<i64: 1, 32, 128>}, {transform_indices = @transform_4, window_bounds = array<i64: 1, 2, 128>}]} {
    %c0 = arith.constant 0 : index
    %c0_0 = arith.constant 0 : index
    %c0_1 = arith.constant 0 : index
    %0 = vector.load %arg1[%c0, %c0_0, %c0_1] : memref<1x34x128xf32, #tpu.memory_space<vmem>>, vector<1x34x128xf32>
    %1 = vector.shape_cast %0 : vector<1x34x128xf32> to vector<34x128xf32>
    %2 = vector.extract_strided_slice %1 {offsets = [0, 0], sizes = [32, 128], strides = [1, 1]} : vector<34x128xf32> to vector<32x128xf32>
    %c1_i32 = arith.constant 1 : i32
    %3 = tpu.dynamic_rotate %2 by %c1_i32 dim 1 : vector<32x128xf32>, i32 -> vector<32x128xf32>
    %c127_i32 = arith.constant 127 : i32
    %4 = tpu.dynamic_rotate %2 by %c127_i32 dim 1 : vector<32x128xf32>, i32 -> vector<32x128xf32>
    %5 = arith.subf %4, %3 : vector<32x128xf32>
    %cst = arith.constant 1.875000e-01 : f32
    %6 = vector.broadcast %cst : f32 to vector<32x128xf32>
    %7 = arith.mulf %5, %6 : vector<32x128xf32>
    %cst_2 = arith.constant 1.875000e-01 : f32
    %8 = vector.broadcast %cst_2 : f32 to vector<32x128xf32>
    %9 = arith.mulf %8, %3 : vector<32x128xf32>
    %cst_3 = arith.constant 6.250000e-01 : f32
    %10 = vector.broadcast %cst_3 : f32 to vector<32x128xf32>
    %11 = arith.mulf %10, %2 : vector<32x128xf32>
    %12 = arith.addf %9, %11 : vector<32x128xf32>
    %cst_4 = arith.constant 1.875000e-01 : f32
    %13 = vector.broadcast %cst_4 : f32 to vector<32x128xf32>
    %14 = arith.mulf %13, %4 : vector<32x128xf32>
    %15 = arith.addf %12, %14 : vector<32x128xf32>
    %16 = vector.extract_strided_slice %1 {offsets = [1, 0], sizes = [32, 128], strides = [1, 1]} : vector<34x128xf32> to vector<32x128xf32>
    %c1_i32_5 = arith.constant 1 : i32
    %17 = tpu.dynamic_rotate %16 by %c1_i32_5 dim 1 : vector<32x128xf32>, i32 -> vector<32x128xf32>
    %c127_i32_6 = arith.constant 127 : i32
    %18 = tpu.dynamic_rotate %16 by %c127_i32_6 dim 1 : vector<32x128xf32>, i32 -> vector<32x128xf32>
    %19 = arith.subf %18, %17 : vector<32x128xf32>
    %cst_7 = arith.constant 6.250000e-01 : f32
    %20 = vector.broadcast %cst_7 : f32 to vector<32x128xf32>
    %21 = arith.mulf %19, %20 : vector<32x128xf32>
    %22 = arith.addf %7, %21 : vector<32x128xf32>
    %23 = vector.extract_strided_slice %1 {offsets = [2, 0], sizes = [32, 128], strides = [1, 1]} : vector<34x128xf32> to vector<32x128xf32>
    %c1_i32_8 = arith.constant 1 : i32
    %24 = tpu.dynamic_rotate %23 by %c1_i32_8 dim 1 : vector<32x128xf32>, i32 -> vector<32x128xf32>
    %c127_i32_9 = arith.constant 127 : i32
    %25 = tpu.dynamic_rotate %23 by %c127_i32_9 dim 1 : vector<32x128xf32>, i32 -> vector<32x128xf32>
    %26 = arith.subf %25, %24 : vector<32x128xf32>
    %cst_10 = arith.constant 1.875000e-01 : f32
    %27 = vector.broadcast %cst_10 : f32 to vector<32x128xf32>
    %28 = arith.mulf %26, %27 : vector<32x128xf32>
    %29 = arith.addf %22, %28 : vector<32x128xf32>
    %cst_11 = arith.constant 1.875000e-01 : f32
    %30 = vector.broadcast %cst_11 : f32 to vector<32x128xf32>
    %31 = arith.mulf %30, %24 : vector<32x128xf32>
    %cst_12 = arith.constant 6.250000e-01 : f32
    %32 = vector.broadcast %cst_12 : f32 to vector<32x128xf32>
    %33 = arith.mulf %32, %23 : vector<32x128xf32>
    %34 = arith.addf %31, %33 : vector<32x128xf32>
    %cst_13 = arith.constant 1.875000e-01 : f32
    %35 = vector.broadcast %cst_13 : f32 to vector<32x128xf32>
    %36 = arith.mulf %35, %25 : vector<32x128xf32>
    %37 = arith.addf %34, %36 : vector<32x128xf32>
    %38 = arith.subf %37, %15 : vector<32x128xf32>
    %39 = arith.mulf %29, %29 : vector<32x128xf32>
    %40 = arith.mulf %38, %38 : vector<32x128xf32>
    %41 = arith.addf %39, %40 : vector<32x128xf32>
    %c0_14 = arith.constant 0 : index
    %c0_15 = arith.constant 0 : index
    %c0_16 = arith.constant 0 : index
    %42 = vector.load %arg2[%c0_14, %c0_15, %c0_16] : memref<1x34x128xf32, #tpu.memory_space<vmem>>, vector<1x34x128xf32>
    %43 = vector.shape_cast %42 : vector<1x34x128xf32> to vector<34x128xf32>
    %44 = vector.extract_strided_slice %43 {offsets = [0, 0], sizes = [32, 128], strides = [1, 1]} : vector<34x128xf32> to vector<32x128xf32>
    %c1_i32_17 = arith.constant 1 : i32
    %45 = tpu.dynamic_rotate %44 by %c1_i32_17 dim 1 : vector<32x128xf32>, i32 -> vector<32x128xf32>
    %c127_i32_18 = arith.constant 127 : i32
    %46 = tpu.dynamic_rotate %44 by %c127_i32_18 dim 1 : vector<32x128xf32>, i32 -> vector<32x128xf32>
    %47 = arith.subf %46, %45 : vector<32x128xf32>
    %cst_19 = arith.constant 1.875000e-01 : f32
    %48 = vector.broadcast %cst_19 : f32 to vector<32x128xf32>
    %49 = arith.mulf %47, %48 : vector<32x128xf32>
    %cst_20 = arith.constant 1.875000e-01 : f32
    %50 = vector.broadcast %cst_20 : f32 to vector<32x128xf32>
    %51 = arith.mulf %50, %45 : vector<32x128xf32>
    %cst_21 = arith.constant 6.250000e-01 : f32
    %52 = vector.broadcast %cst_21 : f32 to vector<32x128xf32>
    %53 = arith.mulf %52, %44 : vector<32x128xf32>
    %54 = arith.addf %51, %53 : vector<32x128xf32>
    %cst_22 = arith.constant 1.875000e-01 : f32
    %55 = vector.broadcast %cst_22 : f32 to vector<32x128xf32>
    %56 = arith.mulf %55, %46 : vector<32x128xf32>
    %57 = arith.addf %54, %56 : vector<32x128xf32>
    %58 = vector.extract_strided_slice %43 {offsets = [1, 0], sizes = [32, 128], strides = [1, 1]} : vector<34x128xf32> to vector<32x128xf32>
    %c1_i32_23 = arith.constant 1 : i32
    %59 = tpu.dynamic_rotate %58 by %c1_i32_23 dim 1 : vector<32x128xf32>, i32 -> vector<32x128xf32>
    %c127_i32_24 = arith.constant 127 : i32
    %60 = tpu.dynamic_rotate %58 by %c127_i32_24 dim 1 : vector<32x128xf32>, i32 -> vector<32x128xf32>
    %61 = arith.subf %60, %59 : vector<32x128xf32>
    %cst_25 = arith.constant 6.250000e-01 : f32
    %62 = vector.broadcast %cst_25 : f32 to vector<32x128xf32>
    %63 = arith.mulf %61, %62 : vector<32x128xf32>
    %64 = arith.addf %49, %63 : vector<32x128xf32>
    %65 = vector.extract_strided_slice %43 {offsets = [2, 0], sizes = [32, 128], strides = [1, 1]} : vector<34x128xf32> to vector<32x128xf32>
    %c1_i32_26 = arith.constant 1 : i32
    %66 = tpu.dynamic_rotate %65 by %c1_i32_26 dim 1 : vector<32x128xf32>, i32 -> vector<32x128xf32>
    %c127_i32_27 = arith.constant 127 : i32
    %67 = tpu.dynamic_rotate %65 by %c127_i32_27 dim 1 : vector<32x128xf32>, i32 -> vector<32x128xf32>
    %68 = arith.subf %67, %66 : vector<32x128xf32>
    %cst_28 = arith.constant 1.875000e-01 : f32
    %69 = vector.broadcast %cst_28 : f32 to vector<32x128xf32>
    %70 = arith.mulf %68, %69 : vector<32x128xf32>
    %71 = arith.addf %64, %70 : vector<32x128xf32>
    %cst_29 = arith.constant 1.875000e-01 : f32
    %72 = vector.broadcast %cst_29 : f32 to vector<32x128xf32>
    %73 = arith.mulf %72, %66 : vector<32x128xf32>
    %cst_30 = arith.constant 6.250000e-01 : f32
    %74 = vector.broadcast %cst_30 : f32 to vector<32x128xf32>
    %75 = arith.mulf %74, %65 : vector<32x128xf32>
    %76 = arith.addf %73, %75 : vector<32x128xf32>
    %cst_31 = arith.constant 1.875000e-01 : f32
    %77 = vector.broadcast %cst_31 : f32 to vector<32x128xf32>
    %78 = arith.mulf %77, %67 : vector<32x128xf32>
    %79 = arith.addf %76, %78 : vector<32x128xf32>
    %80 = arith.subf %79, %57 : vector<32x128xf32>
    %81 = arith.mulf %71, %71 : vector<32x128xf32>
    %82 = arith.mulf %80, %80 : vector<32x128xf32>
    %83 = arith.addf %81, %82 : vector<32x128xf32>
    %c0_32 = arith.constant 0 : index
    %c0_33 = arith.constant 0 : index
    %c0_34 = arith.constant 0 : index
    %84 = vector.load %arg3[%c0_32, %c0_33, %c0_34] : memref<1x32x128xf32, #tpu.memory_space<vmem>>, vector<1x32x128xf32>
    %85 = vector.shape_cast %84 : vector<1x32x128xf32> to vector<32x128xf32>
    %c0_35 = arith.constant 0 : index
    %c0_36 = arith.constant 0 : index
    %c0_37 = arith.constant 0 : index
    %86 = vector.load %arg4[%c0_35, %c0_36, %c0_37] : memref<1x32x128xf32, #tpu.memory_space<vmem>>, vector<1x32x128xf32>
    %87 = vector.shape_cast %86 : vector<1x32x128xf32> to vector<32x128xf32>
    %88 = arith.maximumf %85, %87 : vector<32x128xf32>
    %cst_38 = arith.constant 2.000000e+00 : f32
    %89 = vector.broadcast %cst_38 : f32 to vector<32x128xf32>
    %90 = arith.mulf %89, %85 : vector<32x128xf32>
    %91 = arith.mulf %90, %87 : vector<32x128xf32>
    %cst_39 = arith.constant 8.500000e-01 : f32
    %92 = vector.broadcast %cst_39 : f32 to vector<32x128xf32>
    %93 = arith.addf %91, %92 : vector<32x128xf32>
    %94 = arith.mulf %41, %83 : vector<32x128xf32>
    %95 = math.sqrt %94 : vector<32x128xf32>
    %cst_40 = arith.constant 2.000000e+00 : f32
    %96 = vector.broadcast %cst_40 : f32 to vector<32x128xf32>
    %97 = arith.mulf %96, %95 : vector<32x128xf32>
    %cst_41 = arith.constant 1.600000e+02 : f32
    %98 = vector.broadcast %cst_41 : f32 to vector<32x128xf32>
    %99 = arith.addf %97, %98 : vector<32x128xf32>
    %100 = arith.mulf %93, %99 : vector<32x128xf32>
    %101 = arith.mulf %100, %88 : vector<32x128xf32>
    %102 = arith.mulf %85, %85 : vector<32x128xf32>
    %103 = arith.mulf %87, %87 : vector<32x128xf32>
    %104 = arith.addf %102, %103 : vector<32x128xf32>
    %cst_42 = arith.constant 8.500000e-01 : f32
    %105 = vector.broadcast %cst_42 : f32 to vector<32x128xf32>
    %106 = arith.addf %104, %105 : vector<32x128xf32>
    %107 = arith.addf %41, %83 : vector<32x128xf32>
    %cst_43 = arith.constant 1.600000e+02 : f32
    %108 = vector.broadcast %cst_43 : f32 to vector<32x128xf32>
    %109 = arith.addf %107, %108 : vector<32x128xf32>
    %110 = arith.mulf %106, %109 : vector<32x128xf32>
    %111 = tpu.reciprocal %110 {approx = true} : vector<32x128xf32> -> vector<32x128xf32>
    %112 = arith.mulf %101, %111 : vector<32x128xf32>
    %cst_44 = arith.constant dense<0.000000e+00> : vector<128xf32>
    %113 = vector.multi_reduction <add>, %112, %cst_44 [0] : vector<32x128xf32> to vector<128xf32>
    %114 = vector.shape_cast %113 : vector<128xf32> to vector<1x128xf32>
    %c0_45 = arith.constant 0 : index
    %c0_46 = arith.constant 0 : index
    %c0_47 = arith.constant 0 : index
    %115 = vector.load %arg5[%c0_45, %c0_46, %c0_47] : memref<1x2x128xf32, #tpu.memory_space<vmem>>, vector<1x1x128xf32>
    %116 = vector.shape_cast %115 : vector<1x1x128xf32> to vector<1x128xf32>
    %117 = vector.shape_cast %114 : vector<1x128xf32> to vector<1x1x128xf32>
    tpu.vector_store %arg5[%c0_45, %c0_46, %c0_47], %117 {strides = array<i32>} : memref<1x2x128xf32, #tpu.memory_space<vmem>>, vector<1x1x128xf32>,
    %cst_48 = arith.constant dense<0.000000e+00> : vector<128xf32>
    %118 = vector.multi_reduction <add>, %88, %cst_48 [0] : vector<32x128xf32> to vector<128xf32>
    %119 = vector.shape_cast %118 : vector<128xf32> to vector<1x128xf32>
    %c0_49 = arith.constant 0 : index
    %c1 = arith.constant 1 : index
    %c0_50 = arith.constant 0 : index
    %120 = vector.load %arg5[%c0_49, %c1, %c0_50] : memref<1x2x128xf32, #tpu.memory_space<vmem>>, vector<1x1x128xf32>
    %121 = vector.shape_cast %120 : vector<1x1x128xf32> to vector<1x128xf32>
    %122 = vector.shape_cast %119 : vector<1x128xf32> to vector<1x1x128xf32>
    tpu.vector_store %arg5[%c0_49, %c1, %c0_50], %122 {strides = array<i32>} : memref<1x2x128xf32, #tpu.memory_space<vmem>>, vector<1x1x128xf32>,
    return
  }
  func.func @transform_0(%arg0: i32) -> (i32, i32, i32) {
    %c0_i32 = arith.constant 0 : i32
    %c0_i32_0 = arith.constant 0 : i32
    %c0_i32_1 = arith.constant 0 : i32
    return %arg0, %c0_i32, %c0_i32_0 : i32, i32, i32
  }
  func.func @transform_1(%arg0: i32) -> (i32, i32, i32) {
    %c0_i32 = arith.constant 0 : i32
    %c0_i32_0 = arith.constant 0 : i32
    %c0_i32_1 = arith.constant 0 : i32
    return %arg0, %c0_i32, %c0_i32_0 : i32, i32, i32
  }
  func.func @transform_2(%arg0: i32) -> (i32, i32, i32) {
    %c0_i32 = arith.constant 0 : i32
    %c0_i32_0 = arith.constant 0 : i32
    %c0_i32_1 = arith.constant 0 : i32
    return %arg0, %c0_i32, %c0_i32_0 : i32, i32, i32
  }
  func.func @transform_3(%arg0: i32) -> (i32, i32, i32) {
    %c0_i32 = arith.constant 0 : i32
    %c0_i32_0 = arith.constant 0 : i32
    %c0_i32_1 = arith.constant 0 : i32
    return %arg0, %c0_i32, %c0_i32_0 : i32, i32, i32
  }
  func.func @transform_4(%arg0: i32) -> (i32, i32, i32) {
    %c0_i32 = arith.constant 0 : i32
    %c0_i32_0 = arith.constant 0 : i32
    %c0_i32_1 = arith.constant 0 : i32
    return %arg0, %c0_i32, %c0_i32_0 : i32, i32, i32
  }
}

</mosaic_0001>

<llo_original>
// kernel: fusionloss_forward.2
$region0: #{fusionloss_forward.2}
  #allocation0 [shape = 'u32[]', space=smem, size = 0x4, offset = 0x4, fixed_abs, tag = 'smem constant byte address 0x4 - core index']
  #allocation1 [shape = 'u32[144,128]{1,0:T(1,128)}', space=vmem, size = 0x12000, scoped, tag = 'internal scratch']
  %s0 = inlined_call_operand.vmem [shape: f32[16,128], index: 0, kind: input, shape index: {}]
  %s1 = inlined_call_operand.vmem [shape: f32[16,128], index: 1, kind: input, shape index: {}]
  %s2 = inlined_call_operand.vmem [shape: f32[16,128], index: 2, kind: input, shape index: {}]
  %s3 = inlined_call_operand.vmem [shape: f32[16,128], index: 3, kind: output, shape index: {0}]
  %s4 = inlined_call_operand.vmem [shape: f32[16,128], index: 4, kind: output, shape index: {1}]
  %s5 = inlined_call_operand.vmem [shape: f32[2,8,128], index: 5, kind: output, shape index: {2}]
  %6 = xla_tuple %s3, %s4, %s5
  %s7 = sld [smem:[#allocation0]]
  $region61: #{fusionloss_forward.2} parent=0
    _
  %s9 = ssub.s32 1, %s7
  %s10 = scalar_select 0, %s9, %s7
  loop: start=0, step=1, limit=4
  $region2: #{fusionloss_forward.2} parent=0 // loop_pre_header
    _
  $region3: #{fusionloss_forward.2} parent=0 // loop_header
    %s12 = sphi 0, %s16
    %p13 = scmp.ge.s32.totalorder %s12, 4
    %s22 = sphi 0, %s24
    %s25 = sphi 0, %s22
    %s26 = sphi 0, %s25
    %s42 = sphi 0, %s26
    %s48 = sphi 0, %s50
    %s51 = sphi 0, %s48
    %s52 = sphi 0, %s51
    %s68 = sphi 0, %s52
    %s74 = sphi 0, %s76
    %s77 = sphi 0, %s74
    %s78 = sphi 0, %s77
    %s94 = sphi 0, %s78
    %s100 = sphi 0, %s102
    %s103 = sphi 0, %s100
    %s104 = sphi 0, %s103
    %s120 = sphi 0, %s104
    %s126 = sphi 0, %s128
    %s129 = sphi 0, %s126
    %s130 = sphi 0, %s129
    %s146 = sphi 0, %s130
    %s152 = sphi 0, %s154
    %s155 = sphi 0, %s152
    %s156 = sphi 0, %s155
    %s172 = sphi 0, %s156
  $region4: #{fusionloss_forward.2} parent=0 // loop_header_branch
    %15 = sbr.rel (%p13) target = $region8
  $region5: #{fusionloss_forward.2} parent=0 // loop_body
    %s17 = ssub.s32 %s12, 1
    %s18 = ssub.s32 %s12, 2
    %s19 = sadd.s32 %s12, 1
    %s20 = ssub.s32 %s12, %s19
    %p21 = scmp.eq.s32.totalorder %s20, 0
    %s23 = sadd.s32 %s22, 1
    %s24 = scalar_select %p21, %s22, %s23
    %p27 = pneg %p21
    %p28 = scmp.eq.s32.totalorder %s12, 1
    %p29 = por %p27, %p28
    %p30 = scmp.ne.s32.totalorder %s22, %s25
    %p31 = scmp.eq.s32.totalorder %s12, 0
    %p32 = por %p30, %p31
    %p33 = scmp.ne.s32.totalorder %s22, %s25
    %p34 = scmp.eq.s32.totalorder %s17, 1
    %p35 = por %p33, %p34
    %p36 = scmp.ne.s32.totalorder %s25, %s26
    %p37 = scmp.eq.s32.totalorder %s17, 0
    %p38 = por %p36, %p37
    %p39 = scmp.ne.s32.totalorder %s25, %s26
    %p40 = scmp.eq.s32.totalorder %s18, 1
    %p41 = por %p39, %p40
    %p43 = scmp.ne.s32.totalorder %s26, %s42
    %p44 = scmp.eq.s32.totalorder %s18, 0
    %p45 = por %p43, %p44
    %s46 = ssub.s32 %s12, %s19
    %p47 = scmp.eq.s32.totalorder %s46, 0
    %s49 = sadd.s32 %s48, 1
    %s50 = scalar_select %p47, %s48, %s49
    %p53 = pneg %p47
    %p54 = scmp.eq.s32.totalorder %s12, 1
    %p55 = por %p53, %p54
    %p56 = scmp.ne.s32.totalorder %s48, %s51
    %p57 = scmp.eq.s32.totalorder %s12, 0
    %p58 = por %p56, %p57
    %p59 = scmp.ne.s32.totalorder %s48, %s51
    %p60 = scmp.eq.s32.totalorder %s17, 1
    %p61 = por %p59, %p60
    %p62 = scmp.ne.s32.totalorder %s51, %s52
    %p63 = scmp.eq.s32.totalorder %s17, 0
    %p64 = por %p62, %p63
    %p65 = scmp.ne.s32.totalorder %s51, %s52
    %p66 = scmp.eq.s32.totalorder %s18, 1
    %p67 = por %p65, %p66
    %p69 = scmp.ne.s32.totalorder %s52, %s68
    %p70 = scmp.eq.s32.totalorder %s18, 0
    %p71 = por %p69, %p70
    %s72 = ssub.s32 %s12, %s19
    %p73 = scmp.eq.s32.totalorder %s72, 0
    %s75 = sadd.s32 %s74, 1
    %s76 = scalar_select %p73, %s74, %s75
    %p79 = pneg %p73
    %p80 = scmp.eq.s32.totalorder %s12, 1
    %p81 = por %p79, %p80
    %p82 = scmp.ne.s32.totalorder %s74, %s77
    %p83 = scmp.eq.s32.totalorder %s12, 0
    %p84 = por %p82, %p83
    %p85 = scmp.ne.s32.totalorder %s74, %s77
    %p86 = scmp.eq.s32.totalorder %s17, 1
    %p87 = por %p85, %p86
    %p88 = scmp.ne.s32.totalorder %s77, %s78
    %p89 = scmp.eq.s32.totalorder %s17, 0
    %p90 = por %p88, %p89
    %p91 = scmp.ne.s32.totalorder %s77, %s78
    %p92 = scmp.eq.s32.totalorder %s18, 1
    %p93 = por %p91, %p92
    %p95 = scmp.ne.s32.totalorder %s78, %s94
    %p96 = scmp.eq.s32.totalorder %s18, 0
    %p97 = por %p95, %p96
    %s98 = ssub.s32 %s12, %s19
    %p99 = scmp.eq.s32.totalorder %s98, 0
    %s101 = sadd.s32 %s100, 1
    %s102 = scalar_select %p99, %s100, %s101
    %p105 = pneg %p99
    %p106 = scmp.eq.s32.totalorder %s12, 1
    %p107 = por %p105, %p106
    %p108 = scmp.ne.s32.totalorder %s100, %s103
    %p109 = scmp.eq.s32.totalorder %s12, 0
    %p110 = por %p108, %p109
    %p111 = scmp.ne.s32.totalorder %s100, %s103
    %p112 = scmp.eq.s32.totalorder %s17, 1
    %p113 = por %p111, %p112
    %p114 = scmp.ne.s32.totalorder %s103, %s104
    %p115 = scmp.eq.s32.totalorder %s17, 0
    %p116 = por %p114, %p115
    %p117 = scmp.ne.s32.totalorder %s103, %s104
    %p118 = scmp.eq.s32.totalorder %s18, 1
    %p119 = por %p117, %p118
    %p121 = scmp.ne.s32.totalorder %s104, %s120
    %p122 = scmp.eq.s32.totalorder %s18, 0
    %p123 = por %p121, %p122
    %s124 = ssub.s32 %s12, %s19
    %p125 = scmp.eq.s32.totalorder %s124, 0
    %s127 = sadd.s32 %s126, 1
    %s128 = scalar_select %p125, %s126, %s127
    %p131 = pneg %p125
    %p132 = scmp.eq.s32.totalorder %s12, 1
    %p133 = por %p131, %p132
    %p134 = scmp.ne.s32.totalorder %s126, %s129
    %p135 = scmp.eq.s32.totalorder %s12, 0
    %p136 = por %p134, %p135
    %p137 = scmp.ne.s32.totalorder %s126, %s129
    %p138 = scmp.eq.s32.totalorder %s17, 1
    %p139 = por %p137, %p138
    %p140 = scmp.ne.s32.totalorder %s129, %s130
    %p141 = scmp.eq.s32.totalorder %s17, 0
    %p142 = por %p140, %p141
    %p143 = scmp.ne.s32.totalorder %s129, %s130
    %p144 = scmp.eq.s32.totalorder %s18, 1
    %p145 = por %p143, %p144
    %p147 = scmp.ne.s32.totalorder %s130, %s146
    %p148 = scmp.eq.s32.totalorder %s18, 0
    %p149 = por %p147, %p148
    %s150 = ssub.s32 %s12, %s19
    %p151 = scmp.eq.s32.totalorder %s150, 0
    %s153 = sadd.s32 %s152, 1
    %s154 = scalar_select %p151, %s152, %s153
    %p157 = pneg %p151
    %p158 = scmp.eq.s32.totalorder %s12, 1
    %p159 = por %p157, %p158
    %p160 = scmp.ne.s32.totalorder %s152, %s155
    %p161 = scmp.eq.s32.totalorder %s12, 0
    %p162 = por %p160, %p161
    %p163 = scmp.ne.s32.totalorder %s152, %s155
    %p164 = scmp.eq.s32.totalorder %s17, 1
    %p165 = por %p163, %p164
    %p166 = scmp.ne.s32.totalorder %s155, %s156
    %p167 = scmp.eq.s32.totalorder %s17, 0
    %p168 = por %p166, %p167
    %p169 = scmp.ne.s32.totalorder %s155, %s156
    %p170 = scmp.eq.s32.totalorder %s18, 1
    %p171 = por %p169, %p170
    %p173 = scmp.ne.s32.totalorder %s156, %s172
    %p174 = scmp.eq.s32.totalorder %s18, 0
    %p175 = por %p173, %p174
    %p176 = scmp.le.s32.totalorder 1, %s12
    %p177 = scmp.lt.s32.totalorder %s12, 3
    %p178 = pnand %p176, %p177
    %p179 = pneg %p178
    // Predicated region
    $region9: #{fusionloss_forward.2} parent=5 // pred_check
      _
    $region10: #{fusionloss_forward.2} parent=5 // pred_check_branch
      %181 = sbr.rel (%p178) target = $region12
    $region11: #{fusionloss_forward.2} parent=5 // pred_region
      %s182 = ssub.s32 %s12, 1
    $region12: #{fusionloss_forward.2} parent=5 // pred_fallthru
      _
    %p183 = scmp.lt.s32.totalorder %s12, 2
    // Predicated region
    $region13: #{fusionloss_forward.2} parent=5 // pred_check
      %p184 = pneg %p183
    $region14: #{fusionloss_forward.2} parent=5 // pred_check_branch
      %186 = sbr.rel (%p184) target = $region16
    $region15: #{fusionloss_forward.2} parent=5 // pred_region
      // Predicated region
      $region17: #{fusionloss_forward.2} parent=15 // pred_check
        %p187 = pneg %p32
      $region18: #{fusionloss_forward.2} parent=15 // pred_check_branch
        %189 = sbr.rel (%p187) target = $region20
      $region19: #{fusionloss_forward.2} parent=15 // pred_region
        %p190 = scmp.lt.s32.totalorder %s12, 1
        %s191 = scalar_select %p190, %s12, 1
        %s192 = smul.addr %s191, 8
        %s193 = scalar_lea.vmem %s0, %s192
      $region20: #{fusionloss_forward.2} parent=15 // pred_fallthru
        _
      // Predicated region
      $region21: #{fusionloss_forward.2} parent=15 // pred_check
        %p194 = pneg %p58
      $region22: #{fusionloss_forward.2} parent=15 // pred_check_branch
        %196 = sbr.rel (%p194) target = $region24
      $region23: #{fusionloss_forward.2} parent=15 // pred_region
        %p197 = scmp.lt.s32.totalorder %s12, 1
        %s198 = scalar_select %p197, %s12, 1
        %s199 = smul.addr %s198, 8
        %s200 = scalar_lea.vmem %s1, %s199
      $region24: #{fusionloss_forward.2} parent=15 // pred_fallthru
        _
      // Predicated region
      $region25: #{fusionloss_forward.2} parent=15 // pred_check
        %p201 = pneg %p84
      $region26: #{fusionloss_forward.2} parent=15 // pred_check_branch
        %203 = sbr.rel (%p201) target = $region28
      $region27: #{fusionloss_forward.2} parent=15 // pred_region
        %p204 = scmp.lt.s32.totalorder %s12, 1
        %s205 = scalar_select %p204, %s12, 1
        %s206 = smul.addr %s205, 8
        %s207 = scalar_lea.vmem %s2, %s206
      $region28: #{fusionloss_forward.2} parent=15 // pred_fallthru
        _
    $region16: #{fusionloss_forward.2} parent=5 // pred_fallthru
      _
    %p208 = scmp.le.s32.totalorder 1, %s12
    %p209 = scmp.lt.s32.totalorder %s12, 3
    %p210 = pnand %p208, %p209
    %p211 = pneg %p210
    // Predicated region
    $region29: #{fusionloss_forward.2} parent=5 // pred_check
      _
    $region30: #{fusionloss_forward.2} parent=5 // pred_check_branch
      %213 = sbr.rel (%p210) target = $region32
    $region31: #{fusionloss_forward.2} parent=5 // pred_region
      %s214 = ssub.s32 %s12, 1
      %p215 = scmp.lt.s32.totalorder %s17, 1
      %s216 = scalar_select %p215, %s17, 1
      %s217 = smul.addr %s216, 8
      %s218 = scalar_lea.vmem %s0, %s217
      %p219 = pneg %p38
      %p220 = pneg %p35
      %p221 = scmp.lt.s32.totalorder %s17, 1
      %s222 = scalar_select %p221, %s17, 1
      %s223 = smul.addr %s222, 8
      %s224 = scalar_lea.vmem %s1, %s223
      %p225 = pneg %p64
      %p226 = pneg %p61
      %p227 = scmp.lt.s32.totalorder %s17, 1
      %s228 = scalar_select %p227, %s17, 1
      %s229 = smul.addr %s228, 8
      %s230 = scalar_lea.vmem %s2, %s229
      %p231 = pneg %p90
      %p232 = pneg %p87
      %p233 = pneg %p116
      %p234 = pneg %p113
      %p235 = scmp.lt.s32.totalorder %s17, 1
      %s236 = scalar_select %p235, %s17, 1
      %s237 = smul.addr %s236, 8
      %s238 = scalar_lea.vmem %s3, %s237
      %p239 = pneg %p142
      %p240 = pneg %p139
      %p241 = scmp.lt.s32.totalorder %s17, 1
      %s242 = scalar_select %p241, %s17, 1
      %s243 = smul.addr %s242, 8
      %s244 = scalar_lea.vmem %s4, %s243
      %p245 = pneg %p168
      %p246 = pneg %p165
      %p247 = scmp.lt.s32.totalorder %s17, 1
      %s248 = scalar_select %p247, %s17, 1
      %s249 = smul.addr %s248, 8
      %s250 = scalar_lea.vmem %s5, %s249
      %p251 = scmp.lt.s32.totalorder %s17, 1
      %s252 = scalar_select %p251, %s17, 1
      %s253 = smul.addr %s252, 8
      %s254 = scalar_lea.vmem %s0, %s253
      %p255 = scmp.lt.s32.totalorder %s17, 1
      %s256 = scalar_select %p255, %s17, 1
      %s257 = smul.addr %s256, 8
      %s258 = scalar_lea.vmem %s1, %s257
      %p259 = scmp.lt.s32.totalorder %s17, 1
      %s260 = scalar_select %p259, %s17, 1
      %s261 = smul.addr %s260, 8
      %s262 = scalar_lea.vmem %s2, %s261
      %p263 = scmp.lt.s32.totalorder %s17, 1
      %s264 = scalar_select %p263, %s17, 1
      %s265 = smul.addr %s264, 8
      %s266 = scalar_lea.vmem %s3, %s265
      %p267 = scmp.lt.s32.totalorder %s17, 1
      %s268 = scalar_select %p267, %s17, 1
      %s269 = smul.addr %s268, 8
      %s270 = scalar_lea.vmem %s4, %s269
      %p271 = scmp.lt.s32.totalorder %s17, 1
      %s272 = scalar_select %p271, %s17, 1
      %s273 = smul.addr %s272, 8
      %s274 = scalar_lea.vmem %s5, %s273
      %v275 = vld [vmem:[%s254] sm:$0xff]
      %v276 = vld [vmem:[%s258] sm:$0xff]
      %v277 = vld [vmem:[%s262] sm:$0xff]
      %v278 = vmax.f32 %v275, %v276
      %v279 = vmul.f32 %v278, 255.0
      %280 = vst [vmem:[%s266] sm:$0xff] %v279
      %v281 = vmax.f32 %v277, 1e-05
      %v282 = vmin.f32 %v281, 1.0
      %v283 = vmul.f32 %v282, 255.0
      %284 = vst [vmem:[%s270] sm:$0xff] %v283
      %v285 = vsub.f32 %v278, %v277
      %v286 = vand.u32 2147483647, %v285
      %v287 = vadd.f32 %v286, 0.0
      %288 = vst [vmem:[%s274] sm:$0xff] %v287
      %p289 = scmp.lt.s32.totalorder %s17, 1
      %s290 = scalar_select %p289, %s17, 1
      %s291 = smul.addr %s290, 8
      %s292 = scalar_lea.vmem %s3, %s291
      %p293 = scmp.lt.s32.totalorder %s17, 1
      %s294 = scalar_select %p293, %s17, 1
      %s295 = smul.addr %s294, 8
      %s296 = scalar_lea.vmem %s4, %s295
      %p297 = scmp.lt.s32.totalorder %s17, 1
      %s298 = scalar_select %p297, %s17, 1
      %s299 = smul.addr %s298, 8
      %s300 = scalar_lea.vmem %s5, %s299
      // Predicated region
      $region33: #{fusionloss_forward.2} parent=31 // pred_check
        %p301 = pneg %p113
      $region34: #{fusionloss_forward.2} parent=31 // pred_check_branch
        %303 = sbr.rel (%p301) target = $region36
      $region35: #{fusionloss_forward.2} parent=31 // pred_region
        _
      $region36: #{fusionloss_forward.2} parent=31 // pred_fallthru
        _
      // Predicated region
      $region37: #{fusionloss_forward.2} parent=31 // pred_check
        %p304 = pneg %p139
      $region38: #{fusionloss_forward.2} parent=31 // pred_check_branch
        %306 = sbr.rel (%p304) target = $region40
      $region39: #{fusionloss_forward.2} parent=31 // pred_region
        _
      $region40: #{fusionloss_forward.2} parent=31 // pred_fallthru
        _
      // Predicated region
      $region41: #{fusionloss_forward.2} parent=31 // pred_check
        %p307 = pneg %p165
      $region42: #{fusionloss_forward.2} parent=31 // pred_check_branch
        %309 = sbr.rel (%p307) target = $region44
      $region43: #{fusionloss_forward.2} parent=31 // pred_region
        _
      $region44: #{fusionloss_forward.2} parent=31 // pred_fallthru
        _
    $region32: #{fusionloss_forward.2} parent=5 // pred_fallthru
      _
    %p310 = scmp.le.s32.totalorder 2, %s12
    // Predicated region
    $region45: #{fusionloss_forward.2} parent=5 // pred_check
      %p311 = pneg %p310
    $region46: #{fusionloss_forward.2} parent=5 // pred_check_branch
      %313 = sbr.rel (%p311) target = $region48
    $region47: #{fusionloss_forward.2} parent=5 // pred_region
      %s314 = ssub.s32 %s12, 2
      // Predicated region
      $region49: #{fusionloss_forward.2} parent=47 // pred_check
        %p315 = pneg %p119
      $region50: #{fusionloss_forward.2} parent=47 // pred_check_branch
        %317 = sbr.rel (%p315) target = $region52
      $region51: #{fusionloss_forward.2} parent=47 // pred_region
        %p318 = scmp.lt.s32.totalorder %s18, 1
        %s319 = scalar_select %p318, %s18, 1
        %s320 = smul.addr %s319, 8
        %s321 = scalar_lea.vmem %s3, %s320
      $region52: #{fusionloss_forward.2} parent=47 // pred_fallthru
        _
      // Predicated region
      $region53: #{fusionloss_forward.2} parent=47 // pred_check
        %p322 = pneg %p145
      $region54: #{fusionloss_forward.2} parent=47 // pred_check_branch
        %324 = sbr.rel (%p322) target = $region56
      $region55: #{fusionloss_forward.2} parent=47 // pred_region
        %p325 = scmp.lt.s32.totalorder %s18, 1
        %s326 = scalar_select %p325, %s18, 1
        %s327 = smul.addr %s326, 8
        %s328 = scalar_lea.vmem %s4, %s327
      $region56: #{fusionloss_forward.2} parent=47 // pred_fallthru
        _
      // Predicated region
      $region57: #{fusionloss_forward.2} parent=47 // pred_check
        %p329 = pneg %p171
      $region58: #{fusionloss_forward.2} parent=47 // pred_check_branch
        %331 = sbr.rel (%p329) target = $region60
      $region59: #{fusionloss_forward.2} parent=47 // pred_region
        %p332 = scmp.lt.s32.totalorder %s18, 1
        %s333 = scalar_select %p332, %s18, 1
        %s334 = smul.addr %s333, 8
        %s335 = scalar_lea.vmem %s5, %s334
      $region60: #{fusionloss_forward.2} parent=47 // pred_fallthru
        _
    $region48: #{fusionloss_forward.2} parent=5 // pred_fallthru
      _
  $region6: #{fusionloss_forward.2} parent=0 // loop_footer
    %s16 = sadd.s32 1, %s12
  $region7: #{fusionloss_forward.2} parent=0 // loop_footer_branch
    %11 = sbr.rel target = $region3
  $region8: #{fusionloss_forward.2} parent=0 // loop_exit
    _

// kernel: fusionloss_forward.3
$region0: #{fusionloss_forward.3}
  #allocation0 [shape = 'u32[]', space=smem, size = 0x4, offset = 0x4, fixed_abs, tag = 'smem constant byte address 0x4 - core index']
  #allocation1 [shape = 'u32[144,128]{1,0:T(1,128)}', space=vmem, size = 0x12000, scoped, tag = 'internal scratch']
  %s0 = inlined_call_operand.vmem [shape: f32[2,34,128], index: 0, kind: input, shape index: {}]
  %s1 = inlined_call_operand.vmem [shape: f32[2,34,128], index: 1, kind: input, shape index: {}]
  %s2 = inlined_call_operand.vmem [shape: f32[2,32,128], index: 2, kind: input, shape index: {}]
  %s3 = inlined_call_operand.vmem [shape: f32[2,32,128], index: 3, kind: input, shape index: {}]
  %s4 = inlined_call_operand.vmem [shape: f32[2,2,128], index: 4, kind: output, shape index: {}]
  %s5 = sld [smem:[#allocation0]]
  $region49: #{fusionloss_forward.3} parent=0
    _
  %s7 = ssub.s32 1, %s5
  %s8 = scalar_select 0, %s7, %s5
  loop: start=0, step=1, limit=4
  $region2: #{fusionloss_forward.3} parent=0 // loop_pre_header
    _
  $region3: #{fusionloss_forward.3} parent=0 // loop_header
    %s10 = sphi 0, %s14
    %p11 = scmp.ge.s32.totalorder %s10, 4
    %s20 = sphi 0, %s22
    %s23 = sphi 0, %s20
    %s24 = sphi 0, %s23
    %s40 = sphi 0, %s24
    %s46 = sphi 0, %s48
    %s49 = sphi 0, %s46
    %s50 = sphi 0, %s49
    %s66 = sphi 0, %s50
    %s72 = sphi 0, %s74
    %s75 = sphi 0, %s72
    %s76 = sphi 0, %s75
    %s92 = sphi 0, %s76
    %s98 = sphi 0, %s100
    %s101 = sphi 0, %s98
    %s102 = sphi 0, %s101
    %s118 = sphi 0, %s102
    %s124 = sphi 0, %s126
    %s127 = sphi 0, %s124
    %s128 = sphi 0, %s127
    %s144 = sphi 0, %s128
  $region4: #{fusionloss_forward.3} parent=0 // loop_header_branch
    %13 = sbr.rel (%p11) target = $region8
  $region5: #{fusionloss_forward.3} parent=0 // loop_body
    %s15 = ssub.s32 %s10, 1
    %s16 = ssub.s32 %s10, 2
    %s17 = sadd.s32 %s10, 1
    %s18 = ssub.s32 %s10, %s17
    %p19 = scmp.eq.s32.totalorder %s18, 0
    %s21 = sadd.s32 %s20, 1
    %s22 = scalar_select %p19, %s20, %s21
    %p25 = pneg %p19
    %p26 = scmp.eq.s32.totalorder %s10, 1
    %p27 = por %p25, %p26
    %p28 = scmp.ne.s32.totalorder %s20, %s23
    %p29 = scmp.eq.s32.totalorder %s10, 0
    %p30 = por %p28, %p29
    %p31 = scmp.ne.s32.totalorder %s20, %s23
    %p32 = scmp.eq.s32.totalorder %s15, 1
    %p33 = por %p31, %p32
    %p34 = scmp.ne.s32.totalorder %s23, %s24
    %p35 = scmp.eq.s32.totalorder %s15, 0
    %p36 = por %p34, %p35
    %p37 = scmp.ne.s32.totalorder %s23, %s24
    %p38 = scmp.eq.s32.totalorder %s16, 1
    %p39 = por %p37, %p38
    %p41 = scmp.ne.s32.totalorder %s24, %s40
    %p42 = scmp.eq.s32.totalorder %s16, 0
    %p43 = por %p41, %p42
    %s44 = ssub.s32 %s10, %s17
    %p45 = scmp.eq.s32.totalorder %s44, 0
    %s47 = sadd.s32 %s46, 1
    %s48 = scalar_select %p45, %s46, %s47
    %p51 = pneg %p45
    %p52 = scmp.eq.s32.totalorder %s10, 1
    %p53 = por %p51, %p52
    %p54 = scmp.ne.s32.totalorder %s46, %s49
    %p55 = scmp.eq.s32.totalorder %s10, 0
    %p56 = por %p54, %p55
    %p57 = scmp.ne.s32.totalorder %s46, %s49
    %p58 = scmp.eq.s32.totalorder %s15, 1
    %p59 = por %p57, %p58
    %p60 = scmp.ne.s32.totalorder %s49, %s50
    %p61 = scmp.eq.s32.totalorder %s15, 0
    %p62 = por %p60, %p61
    %p63 = scmp.ne.s32.totalorder %s49, %s50
    %p64 = scmp.eq.s32.totalorder %s16, 1
    %p65 = por %p63, %p64
    %p67 = scmp.ne.s32.totalorder %s50, %s66
    %p68 = scmp.eq.s32.totalorder %s16, 0
    %p69 = por %p67, %p68
    %s70 = ssub.s32 %s10, %s17
    %p71 = scmp.eq.s32.totalorder %s70, 0
    %s73 = sadd.s32 %s72, 1
    %s74 = scalar_select %p71, %s72, %s73
    %p77 = pneg %p71
    %p78 = scmp.eq.s32.totalorder %s10, 1
    %p79 = por %p77, %p78
    %p80 = scmp.ne.s32.totalorder %s72, %s75
    %p81 = scmp.eq.s32.totalorder %s10, 0
    %p82 = por %p80, %p81
    %p83 = scmp.ne.s32.totalorder %s72, %s75
    %p84 = scmp.eq.s32.totalorder %s15, 1
    %p85 = por %p83, %p84
    %p86 = scmp.ne.s32.totalorder %s75, %s76
    %p87 = scmp.eq.s32.totalorder %s15, 0
    %p88 = por %p86, %p87
    %p89 = scmp.ne.s32.totalorder %s75, %s76
    %p90 = scmp.eq.s32.totalorder %s16, 1
    %p91 = por %p89, %p90
    %p93 = scmp.ne.s32.totalorder %s76, %s92
    %p94 = scmp.eq.s32.totalorder %s16, 0
    %p95 = por %p93, %p94
    %s96 = ssub.s32 %s10, %s17
    %p97 = scmp.eq.s32.totalorder %s96, 0
    %s99 = sadd.s32 %s98, 1
    %s100 = scalar_select %p97, %s98, %s99
    %p103 = pneg %p97
    %p104 = scmp.eq.s32.totalorder %s10, 1
    %p105 = por %p103, %p104
    %p106 = scmp.ne.s32.totalorder %s98, %s101
    %p107 = scmp.eq.s32.totalorder %s10, 0
    %p108 = por %p106, %p107
    %p109 = scmp.ne.s32.totalorder %s98, %s101
    %p110 = scmp.eq.s32.totalorder %s15, 1
    %p111 = por %p109, %p110
    %p112 = scmp.ne.s32.totalorder %s101, %s102
    %p113 = scmp.eq.s32.totalorder %s15, 0
    %p114 = por %p112, %p113
    %p115 = scmp.ne.s32.totalorder %s101, %s102
    %p116 = scmp.eq.s32.totalorder %s16, 1
    %p117 = por %p115, %p116
    %p119 = scmp.ne.s32.totalorder %s102, %s118
    %p120 = scmp.eq.s32.totalorder %s16, 0
    %p121 = por %p119, %p120
    %s122 = ssub.s32 %s10, %s17
    %p123 = scmp.eq.s32.totalorder %s122, 0
    %s125 = sadd.s32 %s124, 1
    %s126 = scalar_select %p123, %s124, %s125
    %p129 = pneg %p123
    %p130 = scmp.eq.s32.totalorder %s10, 1
    %p131 = por %p129, %p130
    %p132 = scmp.ne.s32.totalorder %s124, %s127
    %p133 = scmp.eq.s32.totalorder %s10, 0
    %p134 = por %p132, %p133
    %p135 = scmp.ne.s32.totalorder %s124, %s127
    %p136 = scmp.eq.s32.totalorder %s15, 1
    %p137 = por %p135, %p136
    %p138 = scmp.ne.s32.totalorder %s127, %s128
    %p139 = scmp.eq.s32.totalorder %s15, 0
    %p140 = por %p138, %p139
    %p141 = scmp.ne.s32.totalorder %s127, %s128
    %p142 = scmp.eq.s32.totalorder %s16, 1
    %p143 = por %p141, %p142
    %p145 = scmp.ne.s32.totalorder %s128, %s144
    %p146 = scmp.eq.s32.totalorder %s16, 0
    %p147 = por %p145, %p146
    %p148 = scmp.le.s32.totalorder 1, %s10
    %p149 = scmp.lt.s32.totalorder %s10, 3
    %p150 = pnand %p148, %p149
    %p151 = pneg %p150
    // Predicated region
    $region9: #{fusionloss_forward.3} parent=5 // pred_check
      _
    $region10: #{fusionloss_forward.3} parent=5 // pred_check_branch
      %153 = sbr.rel (%p150) target = $region12
    $region11: #{fusionloss_forward.3} parent=5 // pred_region
      %s154 = ssub.s32 %s10, 1
    $region12: #{fusionloss_forward.3} parent=5 // pred_fallthru
      _
    %p155 = scmp.lt.s32.totalorder %s10, 2
    // Predicated region
    $region13: #{fusionloss_forward.3} parent=5 // pred_check
      %p156 = pneg %p155
    $region14: #{fusionloss_forward.3} parent=5 // pred_check_branch
      %158 = sbr.rel (%p156) target = $region16
    $region15: #{fusionloss_forward.3} parent=5 // pred_region
      // Predicated region
      $region17: #{fusionloss_forward.3} parent=15 // pred_check
        %p159 = pneg %p30
      $region18: #{fusionloss_forward.3} parent=15 // pred_check_branch
        %161 = sbr.rel (%p159) target = $region20
      $region19: #{fusionloss_forward.3} parent=15 // pred_region
        %p162 = scmp.lt.s32.totalorder %s10, 1
        %s163 = scalar_select %p162, %s10, 1
        %s164 = smul.addr %s163, 5
        %s165 = smul.addr %s164, 8
        %s166 = scalar_lea.vmem %s0, %s165
      $region20: #{fusionloss_forward.3} parent=15 // pred_fallthru
        _
      // Predicated region
      $region21: #{fusionloss_forward.3} parent=15 // pred_check
        %p167 = pneg %p56
      $region22: #{fusionloss_forward.3} parent=15 // pred_check_branch
        %169 = sbr.rel (%p167) target = $region24
      $region23: #{fusionloss_forward.3} parent=15 // pred_region
        %p170 = scmp.lt.s32.totalorder %s10, 1
        %s171 = scalar_select %p170, %s10, 1
        %s172 = smul.addr %s171, 5
        %s173 = smul.addr %s172, 8
        %s174 = scalar_lea.vmem %s1, %s173
      $region24: #{fusionloss_forward.3} parent=15 // pred_fallthru
        _
      // Predicated region
      $region25: #{fusionloss_forward.3} parent=15 // pred_check
        %p175 = pneg %p82
      $region26: #{fusionloss_forward.3} parent=15 // pred_check_branch
        %177 = sbr.rel (%p175) target = $region28
      $region27: #{fusionloss_forward.3} parent=15 // pred_region
        %p178 = scmp.lt.s32.totalorder %s10, 1
        %s179 = scalar_select %p178, %s10, 1
        %s180 = smul.addr %s179, 4
        %s181 = smul.addr %s180, 8
        %s182 = scalar_lea.vmem %s2, %s181
      $region28: #{fusionloss_forward.3} parent=15 // pred_fallthru
        _
      // Predicated region
      $region29: #{fusionloss_forward.3} parent=15 // pred_check
        %p183 = pneg %p108
      $region30: #{fusionloss_forward.3} parent=15 // pred_check_branch
        %185 = sbr.rel (%p183) target = $region32
      $region31: #{fusionloss_forward.3} parent=15 // pred_region
        %p186 = scmp.lt.s32.totalorder %s10, 1
        %s187 = scalar_select %p186, %s10, 1
        %s188 = smul.addr %s187, 4
        %s189 = smul.addr %s188, 8
        %s190 = scalar_lea.vmem %s3, %s189
      $region32: #{fusionloss_forward.3} parent=15 // pred_fallthru
        _
    $region16: #{fusionloss_forward.3} parent=5 // pred_fallthru
      _
    %p191 = scmp.le.s32.totalorder 1, %s10
    %p192 = scmp.lt.s32.totalorder %s10, 3
    %p193 = pnand %p191, %p192
    %p194 = pneg %p193
    // Predicated region
    $region33: #{fusionloss_forward.3} parent=5 // pred_check
      _
    $region34: #{fusionloss_forward.3} parent=5 // pred_check_branch
      %196 = sbr.rel (%p193) target = $region36
    $region35: #{fusionloss_forward.3} parent=5 // pred_region
      %s197 = ssub.s32 %s10, 1
      %p198 = scmp.lt.s32.totalorder %s15, 1
      %s199 = scalar_select %p198, %s15, 1
      %s200 = smul.addr %s199, 5
      %s201 = smul.addr %s200, 8
      %s202 = scalar_lea.vmem %s0, %s201
      %p203 = pneg %p36
      %p204 = pneg %p33
      %p205 = scmp.lt.s32.totalorder %s15, 1
      %s206 = scalar_select %p205, %s15, 1
      %s207 = smul.addr %s206, 5
      %s208 = smul.addr %s207, 8
      %s209 = scalar_lea.vmem %s1, %s208
      %p210 = pneg %p62
      %p211 = pneg %p59
      %p212 = scmp.lt.s32.totalorder %s15, 1
      %s213 = scalar_select %p212, %s15, 1
      %s214 = smul.addr %s213, 4
      %s215 = smul.addr %s214, 8
      %s216 = scalar_lea.vmem %s2, %s215
      %p217 = pneg %p88
      %p218 = pneg %p85
      %p219 = scmp.lt.s32.totalorder %s15, 1
      %s220 = scalar_select %p219, %s15, 1
      %s221 = smul.addr %s220, 4
      %s222 = smul.addr %s221, 8
      %s223 = scalar_lea.vmem %s3, %s222
      %p224 = pneg %p114
      %p225 = pneg %p111
      %p226 = pneg %p140
      %p227 = pneg %p137
      %p228 = scmp.lt.s32.totalorder %s15, 1
      %s229 = scalar_select %p228, %s15, 1
      %s230 = smul.addr %s229, 2
      %s231 = scalar_lea.vmem %s4, %s230
      %p232 = scmp.lt.s32.totalorder %s15, 1
      %s233 = scalar_select %p232, %s15, 1
      %s234 = smul.addr %s233, 5
      %s235 = smul.addr %s234, 8
      %s236 = scalar_lea.vmem %s0, %s235
      %p237 = scmp.lt.s32.totalorder %s15, 1
      %s238 = scalar_select %p237, %s15, 1
      %s239 = smul.addr %s238, 5
      %s240 = smul.addr %s239, 8
      %s241 = scalar_lea.vmem %s1, %s240
      %p242 = scmp.lt.s32.totalorder %s15, 1
      %s243 = scalar_select %p242, %s15, 1
      %s244 = smul.addr %s243, 4
      %s245 = smul.addr %s244, 8
      %s246 = scalar_lea.vmem %s2, %s245
      %p247 = scmp.lt.s32.totalorder %s15, 1
      %s248 = scalar_select %p247, %s15, 1
      %s249 = smul.addr %s248, 4
      %s250 = smul.addr %s249, 8
      %s251 = scalar_lea.vmem %s3, %s250
      %p252 = scmp.lt.s32.totalorder %s15, 1
      %s253 = scalar_select %p252, %s15, 1
      %s254 = smul.addr %s253, 2
      %s255 = scalar_lea.vmem %s4, %s254
      %v256 = vld [vmem:[%s236] sm:$0xff]
      %v257 = vld [vmem:[%s236 + $0x8] sm:$0xff]
      %v258 = vld [vmem:[%s236 + $0x10] sm:$0xff]
      %v259 = vld [vmem:[%s236 + $0x18] sm:$0xff]
      %v260 = vld [vmem:[%s236 + $0x20] sm:$0x3]
      %261 = vrot.lane.b32.xlu0 %v256, 1
      %v262 = vpop.permute.xlu0 %261
      %263 = vrot.lane.b32.xlu0 %v257, 1
      %v264 = vpop.permute.xlu0 %263
      %265 = vrot.lane.b32.xlu0 %v258, 1
      %v266 = vpop.permute.xlu0 %265
      %267 = vrot.lane.b32.xlu0 %v259, 1
      %v268 = vpop.permute.xlu0 %267
      %269 = vrot.lane.b32.xlu0 %v256, 127
      %v270 = vpop.permute.xlu0 %269
      %271 = vrot.lane.b32.xlu0 %v257, 127
      %v272 = vpop.permute.xlu0 %271
      %273 = vrot.lane.b32.xlu0 %v258, 127
      %v274 = vpop.permute.xlu0 %273
      %275 = vrot.lane.b32.xlu0 %v259, 127
      %v276 = vpop.permute.xlu0 %275
      %v277 = vsub.f32 %v270, %v262
      %v278 = vsub.f32 %v272, %v264
      %v279 = vsub.f32 %v274, %v266
      %v280 = vsub.f32 %v276, %v268
      %v281 = vmul.f32 %v277, 0.1875
      %v282 = vmul.f32 %v278, 0.1875
      %v283 = vmul.f32 %v279, 0.1875
      %v284 = vmul.f32 %v280, 0.1875
      %v285 = vmul.f32 %v262, 0.1875
      %v286 = vmul.f32 %v264, 0.1875
      %v287 = vmul.f32 %v266, 0.1875
      %v288 = vmul.f32 %v268, 0.1875
      %v289 = vmul.f32 %v256, 0.625
      %v290 = vmul.f32 %v257, 0.625
      %v291 = vmul.f32 %v258, 0.625
      %v292 = vmul.f32 %v259, 0.625
      %v293 = vadd.f32 %v285, %v289
      %v294 = vadd.f32 %v286, %v290
      %v295 = vadd.f32 %v287, %v291
      %v296 = vadd.f32 %v288, %v292
      %v297 = vmul.f32 %v270, 0.1875
      %v298 = vmul.f32 %v272, 0.1875
      %v299 = vmul.f32 %v274, 0.1875
      %v300 = vmul.f32 %v276, 0.1875
      %v301 = vadd.f32 %v293, %v297
      %v302 = vadd.f32 %v294, %v298
      %v303 = vadd.f32 %v295, %v299
      %v304 = vadd.f32 %v296, %v300
      %vm310 = vcmask 1046528
      %v311 = vrot.slane %v256, 1
      %v312 = vrot.slane %v257, 1
      %v313 = vsel %vm310, %v311, %v312
      %v314 = vrot.slane %v258, 1
      %v315 = vsel %vm310, %v312, %v314
      %v316 = vrot.slane %v259, 1
      %v317 = vsel %vm310, %v314, %v316
      %v318 = vrot.slane %v260, 1
      %v319 = vsel %vm310, %v316, %v318
      %324 = vrot.lane.b32.xlu0 %v313, 1
      %v325 = vpop.permute.xlu0 %324
      %326 = vrot.lane.b32.xlu0 %v315, 1
      %v327 = vpop.permute.xlu0 %326
      %328 = vrot.lane.b32.xlu0 %v317, 1
      %v329 = vpop.permute.xlu0 %328
      %330 = vrot.lane.b32.xlu0 %v319, 1
      %v331 = vpop.permute.xlu0 %330
      %332 = vrot.lane.b32.xlu0 %v313, 127
      %v333 = vpop.permute.xlu0 %332
      %334 = vrot.lane.b32.xlu0 %v315, 127
      %v335 = vpop.permute.xlu0 %334
      %336 = vrot.lane.b32.xlu0 %v317, 127
      %v337 = vpop.permute.xlu0 %336
      %338 = vrot.lane.b32.xlu0 %v319, 127
      %v339 = vpop.permute.xlu0 %338
      %v340 = vsub.f32 %v333, %v325
      %v341 = vsub.f32 %v335, %v327
      %v342 = vsub.f32 %v337, %v329
      %v343 = vsub.f32 %v339, %v331
      %v344 = vmul.f32 %v340, 0.625
      %v345 = vmul.f32 %v341, 0.625
      %v346 = vmul.f32 %v342, 0.625
      %v347 = vmul.f32 %v343, 0.625
      %v348 = vadd.f32 %v281, %v344
      %v349 = vadd.f32 %v282, %v345
      %v350 = vadd.f32 %v283, %v346
      %v351 = vadd.f32 %v284, %v347
      %vm352 = vcmask 1045504
      %v353 = vrot.slane %v256, 2
      %v354 = vrot.slane %v257, 2
      %v355 = vsel %vm352, %v353, %v354
      %v356 = vrot.slane %v258, 2
      %v357 = vsel %vm352, %v354, %v356
      %v358 = vrot.slane %v259, 2
      %v359 = vsel %vm352, %v356, %v358
      %v360 = vrot.slane %v260, 2
      %v361 = vsel %vm352, %v358, %v360
      %366 = vrot.lane.b32.xlu0 %v355, 1
      %v367 = vpop.permute.xlu0 %366
      %368 = vrot.lane.b32.xlu0 %v357, 1
      %v369 = vpop.permute.xlu0 %368
      %370 = vrot.lane.b32.xlu0 %v359, 1
      %v371 = vpop.permute.xlu0 %370
      %372 = vrot.lane.b32.xlu0 %v361, 1
      %v373 = vpop.permute.xlu0 %372
      %374 = vrot.lane.b32.xlu0 %v355, 127
      %v375 = vpop.permute.xlu0 %374
      %376 = vrot.lane.b32.xlu0 %v357, 127
      %v377 = vpop.permute.xlu0 %376
      %378 = vrot.lane.b32.xlu0 %v359, 127
      %v379 = vpop.permute.xlu0 %378
      %380 = vrot.lane.b32.xlu0 %v361, 127
      %v381 = vpop.permute.xlu0 %380
      %v382 = vsub.f32 %v375, %v367
      %v383 = vsub.f32 %v377, %v369
      %v384 = vsub.f32 %v379, %v371
      %v385 = vsub.f32 %v381, %v373
      %v386 = vmul.f32 %v382, 0.1875
      %v387 = vmul.f32 %v383, 0.1875
      %v388 = vmul.f32 %v384, 0.1875
      %v389 = vmul.f32 %v385, 0.1875
      %v390 = vadd.f32 %v348, %v386
      %v391 = vadd.f32 %v349, %v387
      %v392 = vadd.f32 %v350, %v388
      %v393 = vadd.f32 %v351, %v389
      %v394 = vmul.f32 %v367, 0.1875
      %v395 = vmul.f32 %v369, 0.1875
      %v396 = vmul.f32 %v371, 0.1875
      %v397 = vmul.f32 %v373, 0.1875
      %v398 = vmul.f32 %v260, 0.625
      %v404 = vrot.slane %v289, 2
      %v405 = vrot.slane %v290, 2
      %v406 = vsel %vm352, %v404, %v405
      %v407 = vrot.slane %v291, 2
      %v408 = vsel %vm352, %v405, %v407
      %v409 = vrot.slane %v292, 2
      %v410 = vsel %vm352, %v407, %v409
      %v411 = vrot.slane %v398, 2
      %v412 = vsel %vm352, %v409, %v411
      %v417 = vadd.f32 %v394, %v406
      %v418 = vadd.f32 %v395, %v408
      %v419 = vadd.f32 %v396, %v410
      %v420 = vadd.f32 %v397, %v412
      %v421 = vmul.f32 %v375, 0.1875
      %v422 = vmul.f32 %v377, 0.1875
      %v423 = vmul.f32 %v379, 0.1875
      %v424 = vmul.f32 %v381, 0.1875
      %v425 = vadd.f32 %v417, %v421
      %v426 = vadd.f32 %v418, %v422
      %v427 = vadd.f32 %v419, %v423
      %v428 = vadd.f32 %v420, %v424
      %v429 = vsub.f32 %v425, %v301
      %v430 = vsub.f32 %v426, %v302
      %v431 = vsub.f32 %v427, %v303
      %v432 = vsub.f32 %v428, %v304
      %v433 = vmul.f32 %v390, %v390
      %v434 = vmul.f32 %v391, %v391
      %v435 = vmul.f32 %v392, %v392
      %v436 = vmul.f32 %v393, %v393
      %v437 = vmul.f32 %v429, %v429
      %v438 = vmul.f32 %v430, %v430
      %v439 = vmul.f32 %v431, %v431
      %v440 = vmul.f32 %v432, %v432
      %v441 = vadd.f32 %v433, %v437
      %v442 = vadd.f32 %v434, %v438
      %v443 = vadd.f32 %v435, %v439
      %v444 = vadd.f32 %v436, %v440
      %v445 = vld [vmem:[%s241] sm:$0xff]
      %v446 = vld [vmem:[%s241 + $0x8] sm:$0xff]
      %v447 = vld [vmem:[%s241 + $0x10] sm:$0xff]
      %v448 = vld [vmem:[%s241 + $0x18] sm:$0xff]
      %v449 = vld [vmem:[%s241 + $0x20] sm:$0x3]
      %450 = vrot.lane.b32.xlu0 %v445, 1
      %v451 = vpop.permute.xlu0 %450
      %452 = vrot.lane.b32.xlu0 %v446, 1
      %v453 = vpop.permute.xlu0 %452
      %454 = vrot.lane.b32.xlu0 %v447, 1
      %v455 = vpop.permute.xlu0 %454
      %456 = vrot.lane.b32.xlu0 %v448, 1
      %v457 = vpop.permute.xlu0 %456
      %458 = vrot.lane.b32.xlu0 %v445, 127
      %v459 = vpop.permute.xlu0 %458
      %460 = vrot.lane.b32.xlu0 %v446, 127
      %v461 = vpop.permute.xlu0 %460
      %462 = vrot.lane.b32.xlu0 %v447, 127
      %v463 = vpop.permute.xlu0 %462
      %464 = vrot.lane.b32.xlu0 %v448, 127
      %v465 = vpop.permute.xlu0 %464
      %v466 = vsub.f32 %v459, %v451
      %v467 = vsub.f32 %v461, %v453
      %v468 = vsub.f32 %v463, %v455
      %v469 = vsub.f32 %v465, %v457
      %v470 = vmul.f32 %v466, 0.1875
      %v471 = vmul.f32 %v467, 0.1875
      %v472 = vmul.f32 %v468, 0.1875
      %v473 = vmul.f32 %v469, 0.1875
      %v474 = vmul.f32 %v451, 0.1875
      %v475 = vmul.f32 %v453, 0.1875
      %v476 = vmul.f32 %v455, 0.1875
      %v477 = vmul.f32 %v457, 0.1875
      %v478 = vmul.f32 %v445, 0.625
      %v479 = vmul.f32 %v446, 0.625
      %v480 = vmul.f32 %v447, 0.625
      %v481 = vmul.f32 %v448, 0.625
      %v482 = vadd.f32 %v474, %v478
      %v483 = vadd.f32 %v475, %v479
      %v484 = vadd.f32 %v476, %v480
      %v485 = vadd.f32 %v477, %v481
      %v486 = vmul.f32 %v459, 0.1875
      %v487 = vmul.f32 %v461, 0.1875
      %v488 = vmul.f32 %v463, 0.1875
      %v489 = vmul.f32 %v465, 0.1875
      %v490 = vadd.f32 %v482, %v486
      %v491 = vadd.f32 %v483, %v487
      %v492 = vadd.f32 %v484, %v488
      %v493 = vadd.f32 %v485, %v489
      %v499 = vrot.slane %v445, 1
      %v500 = vrot.slane %v446, 1
      %v501 = vsel %vm310, %v499, %v500
      %v502 = vrot.slane %v447, 1
      %v503 = vsel %vm310, %v500, %v502
      %v504 = vrot.slane %v448, 1
      %v505 = vsel %vm310, %v502, %v504
      %v506 = vrot.slane %v449, 1
      %v507 = vsel %vm310, %v504, %v506
      %512 = vrot.lane.b32.xlu0 %v501, 1
      %v513 = vpop.permute.xlu0 %512
      %514 = vrot.lane.b32.xlu0 %v503, 1
      %v515 = vpop.permute.xlu0 %514
      %516 = vrot.lane.b32.xlu0 %v505, 1
      %v517 = vpop.permute.xlu0 %516
      %518 = vrot.lane.b32.xlu0 %v507, 1
      %v519 = vpop.permute.xlu0 %518
      %520 = vrot.lane.b32.xlu0 %v501, 127
      %v521 = vpop.permute.xlu0 %520
      %522 = vrot.lane.b32.xlu0 %v503, 127
      %v523 = vpop.permute.xlu0 %522
      %524 = vrot.lane.b32.xlu0 %v505, 127
      %v525 = vpop.permute.xlu0 %524
      %526 = vrot.lane.b32.xlu0 %v507, 127
      %v527 = vpop.permute.xlu0 %526
      %v528 = vsub.f32 %v521, %v513
      %v529 = vsub.f32 %v523, %v515
      %v530 = vsub.f32 %v525, %v517
      %v531 = vsub.f32 %v527, %v519
      %v532 = vmul.f32 %v528, 0.625
      %v533 = vmul.f32 %v529, 0.625
      %v534 = vmul.f32 %v530, 0.625
      %v535 = vmul.f32 %v531, 0.625
      %v536 = vadd.f32 %v470, %v532
      %v537 = vadd.f32 %v471, %v533
      %v538 = vadd.f32 %v472, %v534
      %v539 = vadd.f32 %v473, %v535
      %v540 = vrot.slane %v445, 2
      %v541 = vrot.slane %v446, 2
      %v542 = vsel %vm352, %v540, %v541
      %v543 = vrot.slane %v447, 2
      %v544 = vsel %vm352, %v541, %v543
      %v545 = vrot.slane %v448, 2
      %v546 = vsel %vm352, %v543, %v545
      %v547 = vrot.slane %v449, 2
      %v548 = vsel %vm352, %v545, %v547
      %553 = vrot.lane.b32.xlu0 %v542, 1
      %v554 = vpop.permute.xlu0 %553
      %555 = vrot.lane.b32.xlu0 %v544, 1
      %v556 = vpop.permute.xlu0 %555
      %557 = vrot.lane.b32.xlu0 %v546, 1
      %v558 = vpop.permute.xlu0 %557
      %559 = vrot.lane.b32.xlu0 %v548, 1
      %v560 = vpop.permute.xlu0 %559
      %561 = vrot.lane.b32.xlu0 %v542, 127
      %v562 = vpop.permute.xlu0 %561
      %563 = vrot.lane.b32.xlu0 %v544, 127
      %v564 = vpop.permute.xlu0 %563
      %565 = vrot.lane.b32.xlu0 %v546, 127
      %v566 = vpop.permute.xlu0 %565
      %567 = vrot.lane.b32.xlu0 %v548, 127
      %v568 = vpop.permute.xlu0 %567
      %v569 = vsub.f32 %v562, %v554
      %v570 = vsub.f32 %v564, %v556
      %v571 = vsub.f32 %v566, %v558
      %v572 = vsub.f32 %v568, %v560
      %v573 = vmul.f32 %v569, 0.1875
      %v574 = vmul.f32 %v570, 0.1875
      %v575 = vmul.f32 %v571, 0.1875
      %v576 = vmul.f32 %v572, 0.1875
      %v577 = vadd.f32 %v536, %v573
      %v578 = vadd.f32 %v537, %v574
      %v579 = vadd.f32 %v538, %v575
      %v580 = vadd.f32 %v539, %v576
      %v581 = vmul.f32 %v554, 0.1875
      %v582 = vmul.f32 %v556, 0.1875
      %v583 = vmul.f32 %v558, 0.1875
      %v584 = vmul.f32 %v560, 0.1875
      %v585 = vmul.f32 %v449, 0.625
      %v591 = vrot.slane %v478, 2
      %v592 = vrot.slane %v479, 2
      %v593 = vsel %vm352, %v591, %v592
      %v594 = vrot.slane %v480, 2
      %v595 = vsel %vm352, %v592, %v594
      %v596 = vrot.slane %v481, 2
      %v597 = vsel %vm352, %v594, %v596
      %v598 = vrot.slane %v585, 2
      %v599 = vsel %vm352, %v596, %v598
      %v604 = vadd.f32 %v581, %v593
      %v605 = vadd.f32 %v582, %v595
      %v606 = vadd.f32 %v583, %v597
      %v607 = vadd.f32 %v584, %v599
      %v608 = vmul.f32 %v562, 0.1875
      %v609 = vmul.f32 %v564, 0.1875
      %v610 = vmul.f32 %v566, 0.1875
      %v611 = vmul.f32 %v568, 0.1875
      %v612 = vadd.f32 %v604, %v608
      %v613 = vadd.f32 %v605, %v609
      %v614 = vadd.f32 %v606, %v610
      %v615 = vadd.f32 %v607, %v611
      %v616 = vsub.f32 %v612, %v490
      %v617 = vsub.f32 %v613, %v491
      %v618 = vsub.f32 %v614, %v492
      %v619 = vsub.f32 %v615, %v493
      %v620 = vmul.f32 %v577, %v577
      %v621 = vmul.f32 %v578, %v578
      %v622 = vmul.f32 %v579, %v579
      %v623 = vmul.f32 %v580, %v580
      %v624 = vmul.f32 %v616, %v616
      %v625 = vmul.f32 %v617, %v617
      %v626 = vmul.f32 %v618, %v618
      %v627 = vmul.f32 %v619, %v619
      %v628 = vadd.f32 %v620, %v624
      %v629 = vadd.f32 %v621, %v625
      %v630 = vadd.f32 %v622, %v626
      %v631 = vadd.f32 %v623, %v627
      %v632 = vld [vmem:[%s246] sm:$0xff]
      %v633 = vld [vmem:[%s246 + $0x8] sm:$0xff]
      %v634 = vld [vmem:[%s246 + $0x10] sm:$0xff]
      %v635 = vld [vmem:[%s246 + $0x18] sm:$0xff]
      %v636 = vld [vmem:[%s251] sm:$0xff]
      %v637 = vld [vmem:[%s251 + $0x8] sm:$0xff]
      %v638 = vld [vmem:[%s251 + $0x10] sm:$0xff]
      %v639 = vld [vmem:[%s251 + $0x18] sm:$0xff]
      %v640 = vmax.f32 %v632, %v636
      %v641 = vmax.f32 %v633, %v637
      %v642 = vmax.f32 %v634, %v638
      %v643 = vmax.f32 %v635, %v639
      %v644 = vmul.f32 %v632, 2.0
      %v645 = vmul.f32 %v633, 2.0
      %v646 = vmul.f32 %v634, 2.0
      %v647 = vmul.f32 %v635, 2.0
      %v648 = vmul.f32 %v644, %v636
      %v649 = vmul.f32 %v645, %v637
      %v650 = vmul.f32 %v646, %v638
      %v651 = vmul.f32 %v647, %v639
      %v652 = vadd.f32 %v648, 0.85
      %v653 = vadd.f32 %v649, 0.85
      %v654 = vadd.f32 %v650, 0.85
      %v655 = vadd.f32 %v651, 0.85
      %v656 = vmul.f32 %v441, %v628
      %v657 = vmul.f32 %v442, %v629
      %v658 = vmul.f32 %v443, %v630
      %v659 = vmul.f32 %v444, %v631
      %v660 = vrsqrt.pop %v656
      %v661 = vmul.f32 %v656, %v660
      %vm662 = vcmp.eq.f32.partialorder %v656, inf
      %v663 = vsel %vm662, %v656, %v661
      %vm664 = vcmp.eq.f32.partialorder %v656, 0.0
      %v665 = vand.u32 %v656, 2147483648
      %v666 = vsel %vm664, %v665, %v663
      %v667 = vrsqrt.pop %v657
      %v668 = vmul.f32 %v657, %v667
      %vm669 = vcmp.eq.f32.partialorder %v657, inf
      %v670 = vsel %vm669, %v657, %v668
      %vm671 = vcmp.eq.f32.partialorder %v657, 0.0
      %v672 = vand.u32 %v657, 2147483648
      %v673 = vsel %vm671, %v672, %v670
      %v674 = vrsqrt.pop %v658
      %v675 = vmul.f32 %v658, %v674
      %vm676 = vcmp.eq.f32.partialorder %v658, inf
      %v677 = vsel %vm676, %v658, %v675
      %vm678 = vcmp.eq.f32.partialorder %v658, 0.0
      %v679 = vand.u32 %v658, 2147483648
      %v680 = vsel %vm678, %v679, %v677
      %v681 = vrsqrt.pop %v659
      %v682 = vmul.f32 %v659, %v681
      %vm683 = vcmp.eq.f32.partialorder %v659, inf
      %v684 = vsel %vm683, %v659, %v682
      %vm685 = vcmp.eq.f32.partialorder %v659, 0.0
      %v686 = vand.u32 %v659, 2147483648
      %v687 = vsel %vm685, %v686, %v684
      %v688 = vmul.f32 %v666, 2.0
      %v689 = vmul.f32 %v673, 2.0
      %v690 = vmul.f32 %v680, 2.0
      %v691 = vmul.f32 %v687, 2.0
      %v692 = vadd.f32 %v688, 160.0
      %v693 = vadd.f32 %v689, 160.0
      %v694 = vadd.f32 %v690, 160.0
      %v695 = vadd.f32 %v691, 160.0
      %v696 = vmul.f32 %v652, %v692
      %v697 = vmul.f32 %v653, %v693
      %v698 = vmul.f32 %v654, %v694
      %v699 = vmul.f32 %v655, %v695
      %v700 = vmul.f32 %v696, %v640
      %v701 = vmul.f32 %v697, %v641
      %v702 = vmul.f32 %v698, %v642
      %v703 = vmul.f32 %v699, %v643
      %v704 = vmul.f32 %v632, %v632
      %v705 = vmul.f32 %v633, %v633
      %v706 = vmul.f32 %v634, %v634
      %v707 = vmul.f32 %v635, %v635
      %v708 = vmul.f32 %v636, %v636
      %v709 = vmul.f32 %v637, %v637
      %v710 = vmul.f32 %v638, %v638
      %v711 = vmul.f32 %v639, %v639
      %v712 = vadd.f32 %v704, %v708
      %v713 = vadd.f32 %v705, %v709
      %v714 = vadd.f32 %v706, %v710
      %v715 = vadd.f32 %v707, %v711
      %v716 = vadd.f32 %v712, 0.85
      %v717 = vadd.f32 %v713, 0.85
      %v718 = vadd.f32 %v714, 0.85
      %v719 = vadd.f32 %v715, 0.85
      %v720 = vadd.f32 %v441, %v628
      %v721 = vadd.f32 %v442, %v629
      %v722 = vadd.f32 %v443, %v630
      %v723 = vadd.f32 %v444, %v631
      %v724 = vadd.f32 %v720, 160.0
      %v725 = vadd.f32 %v721, 160.0
      %v726 = vadd.f32 %v722, 160.0
      %v727 = vadd.f32 %v723, 160.0
      %v728 = vmul.f32 %v716, %v724
      %v729 = vmul.f32 %v717, %v725
      %v730 = vmul.f32 %v718, %v726
      %v731 = vmul.f32 %v719, %v727
      %v732 = vrcp.pop %v728
      %v733 = vrcp.pop %v729
      %v734 = vrcp.pop %v730
      %v735 = vrcp.pop %v731
      %v736 = vmul.f32 %v700, %v732
      %v737 = vmul.f32 %v701, %v733
      %v738 = vmul.f32 %v702, %v734
      %v739 = vmul.f32 %v703, %v735
      %v740 = vadd.f32 %v736, %v737
      %v741 = vadd.f32 %v740, %v738
      %v742 = vadd.f32 %v741, %v739
      %v743 = vrot.slane %v742, 4
      %v744 = vadd.f32 %v742, %v743
      %v745 = vrot.slane %v744, 2
      %v746 = vadd.f32 %v744, %v745
      %v747 = vrot.slane %v746, 1
      %v748 = vadd.f32 %v746, %v747
      %749 = vst [vmem:[%s255] sm:$0x1] %v748
      %v750 = vadd.f32 %v640, %v641
      %v751 = vadd.f32 %v750, %v642
      %v752 = vadd.f32 %v751, %v643
      %v753 = vrot.slane %v752, 4
      %v754 = vadd.f32 %v752, %v753
      %v755 = vrot.slane %v754, 2
      %v756 = vadd.f32 %v754, %v755
      %v757 = vrot.slane %v756, 1
      %v758 = vadd.f32 %v756, %v757
      %759 = vst [vmem:[%s255 + $0x1] sm:$0x1] %v758
      %p760 = scmp.lt.s32.totalorder %s15, 1
      %s761 = scalar_select %p760, %s15, 1
      %s762 = smul.addr %s761, 2
      %s763 = scalar_lea.vmem %s4, %s762
      // Predicated region
      $region37: #{fusionloss_forward.3} parent=35 // pred_check
        %p764 = pneg %p137
      $region38: #{fusionloss_forward.3} parent=35 // pred_check_branch
        %766 = sbr.rel (%p764) target = $region40
      $region39: #{fusionloss_forward.3} parent=35 // pred_region
        _
      $region40: #{fusionloss_forward.3} parent=35 // pred_fallthru
        _
    $region36: #{fusionloss_forward.3} parent=5 // pred_fallthru
      _
    %p767 = scmp.le.s32.totalorder 2, %s10
    // Predicated region
    $region41: #{fusionloss_forward.3} parent=5 // pred_check
      %p768 = pneg %p767
    $region42: #{fusionloss_forward.3} parent=5 // pred_check_branch
      %770 = sbr.rel (%p768) target = $region44
    $region43: #{fusionloss_forward.3} parent=5 // pred_region
      %s771 = ssub.s32 %s10, 2
      // Predicated region
      $region45: #{fusionloss_forward.3} parent=43 // pred_check
        %p772 = pneg %p143
      $region46: #{fusionloss_forward.3} parent=43 // pred_check_branch
        %774 = sbr.rel (%p772) target = $region48
      $region47: #{fusionloss_forward.3} parent=43 // pred_region
        %p775 = scmp.lt.s32.totalorder %s16, 1
        %s776 = scalar_select %p775, %s16, 1
        %s777 = smul.addr %s776, 2
        %s778 = scalar_lea.vmem %s4, %s777
      $region48: #{fusionloss_forward.3} parent=43 // pred_fallthru
        _
    $region44: #{fusionloss_forward.3} parent=5 // pred_fallthru
      _
  $region6: #{fusionloss_forward.3} parent=0 // loop_footer
    %s14 = sadd.s32 1, %s10
  $region7: #{fusionloss_forward.3} parent=0 // loop_footer_branch
    %9 = sbr.rel target = $region3
  $region8: #{fusionloss_forward.3} parent=0 // loop_exit
    _

</llo_original>
